<compile_context>
chip_gen: v7x
topology: tpu7x:2x2x1
jax: 0.10.0
libtpu: 0.0.40
codegen_flags: <defaults>
</compile_context>

<pallas_src>
import functools

import jax
import jax.numpy as jnp
from jax.experimental import pallas as pl
from jax.experimental.pallas import tpu as pltpu


def t1_kernel(xbf_ref, lhat_ref, t1_ref, acc_ref):
    """Pass 1:  T1^T[:, j] = sum_k X^T[:, k] @ Lhat^T[k, j].

    xbf_ref:  [F, TK]  bf16  column block of X^T (contraction view, index k)
    lhat_ref: [TK, TN] bf16  block of Lhat^T
    t1_ref:   [F, TN]  bf16  output block of T1^T
    acc_ref:  [F, TN]  f32   accumulator, resident across the k axis
    """
    k = pl.program_id(1)

    @pl.when(k == 0)
    def _():
        acc_ref[...] = jnp.zeros_like(acc_ref)

    acc_ref[...] += jnp.dot(
        xbf_ref[...], lhat_ref[...], preferred_element_type=jnp.float32
    )

    @pl.when(k == pl.num_programs(1) - 1)
    def _():
        t1_ref[...] = acc_ref[...].astype(t1_ref.dtype)


def cheb_out_kernel(t1k_ref, lhat_ref, x_ref, t1j_ref,
                    w0m2_ref, w1_ref, w2x2_ref, b_ref, o_ref, acc_ref):
    """Pass 2:  acc = T1^T @ Lhat^T, then the folded output
        out^T[:, j] = (W0-W2)^T T0^T[:, j] + W1^T T1^T[:, j] + 2 W2^T acc + b,
    followed by ReLU.  (2*acc - T0 never materializes: W2 is folded.)

    t1k_ref:  [F, TK]  bf16  column block of T1^T (contraction view, index k)
    lhat_ref: [TK, TN] bf16  block of Lhat^T
    x_ref:    [F, TN]  f32   column block of X^T   (epilogue view, index j)
    t1j_ref:  [F, TN]  bf16  column block of T1^T  (epilogue view, index j)
    w0m2_ref: [C, F]   f32   (W0 - W2)^T
    w1_ref:   [C, F]   f32   W1^T
    w2x2_ref: [C, F]   f32   2 * W2^T
    b_ref:    [C, 1]   f32   bias
    o_ref:    [C, TN]  f32   output block (lane-dense)
    acc_ref:  [F, TN]  f32   accumulator for the Lhat^T contraction
    """
    k = pl.program_id(1)

    @pl.when(k == 0)
    def _():
        acc_ref[...] = jnp.zeros_like(acc_ref)

    acc_ref[...] += jnp.dot(
        t1k_ref[...], lhat_ref[...], preferred_element_type=jnp.float32
    )

    @pl.when(k == pl.num_programs(1) - 1)
    def _():
        out = jnp.dot(w0m2_ref[...], x_ref[...],
                      preferred_element_type=jnp.float32)
        out += jnp.dot(w1_ref[...], t1j_ref[...].astype(jnp.float32),
                       preferred_element_type=jnp.float32)
        out += jnp.dot(w2x2_ref[...], acc_ref[...],
                       preferred_element_type=jnp.float32)
        out += b_ref[...]                      # [C, 1] broadcast along lanes
        o_ref[...] = jnp.maximum(out, 0.0)


def build_lhat_t(edge_index, num_nodes):
    """Dense Lhat^T, Lhat = -D^{-1/2} A D^{-1/2} (PyG ChebConv sym norm, lambda_max=2).

    NOTE: degree is computed from edge_index[0]; this matches PyG only when the
    edge list contains both directions of every undirected edge (as here).
    """
    row = edge_index[0]
    col = edge_index[1]
    w = jnp.ones(row.shape[0], dtype=jnp.float32)
    deg = jnp.zeros((num_nodes,), jnp.float32).at[row].add(w)
    dinv = jnp.where(deg > 0, 1.0 / jnp.sqrt(deg), 0.0)
    norm = -dinv[row] * w * dinv[col]
    # propagate(): out[col] += norm * x[row]  =>  Lhat[col, row] = norm,
    # so the transposed operator is Lhat^T[row, col] = norm.
    return jnp.zeros((num_nodes, num_nodes), jnp.float32).at[row, col].add(norm)


@functools.partial(jax.jit, static_argnames=("tile_nodes",))
def gcnn_block_forward(x, edge_index, weights, bias, *, tile_nodes=256):
    """x: [N, F], edge_index: [2, E] int, weights: [3, F, C], bias: [C] -> [N, C]."""
    n, f = x.shape
    c_out = weights.shape[-1]
    n_pad = ((n + tile_nodes - 1) // tile_nodes) * tile_nodes
    pad = n_pad - n

    # Zero-padding of nodes is exact: padded rows/cols of Lhat^T and padded
    # columns of X^T are zero, so real output columns are unchanged.
    lhat_t = build_lhat_t(edge_index, n)
    lhat_t = jnp.pad(lhat_t, ((0, pad), (0, pad))).astype(jnp.bfloat16)  # [Np, Np]
    x_t = jnp.pad(x.astype(jnp.float32).T, ((0, 0), (0, pad)))           # [F, Np] f32
    x_bf = x_t.astype(jnp.bfloat16)                                      # [F, Np] bf16

    w = weights.astype(jnp.float32)
    w0m2 = (w[0] - w[2]).T                                               # [C, F]
    w1t = w[1].T                                                         # [C, F]
    w2x2 = (2.0 * w[2]).T                                                # [C, F]
    b2d = bias.astype(jnp.float32).reshape(c_out, 1)                     # [C, 1]

    grid = (n_pad // tile_nodes, n_pad // tile_nodes)  # (node tiles, contraction tiles)
    cparams = pltpu.CompilerParams(
        dimension_semantics=("parallel", "arbitrary"),  # node tiles shardable across TCs
        vmem_limit_bytes=48 * 1024 * 1024,              # stays within v7x's 64 MiB VMEM
    )

    # Pass 1: T1^T = X^T @ Lhat^T  (stored bf16 -- that is all pass 2 needs).
    t1_bf = pl.pallas_call(
        t1_kernel,
        out_shape=jax.ShapeDtypeStruct((f, n_pad), jnp.bfloat16),
        grid_spec=pltpu.PrefetchScalarGridSpec(
            num_scalar_prefetch=0,
            grid=grid,
            in_specs=[
                pl.BlockSpec((f, tile_nodes), lambda j, k: (0, k)),           # X^T  (k)
                pl.BlockSpec((tile_nodes, tile_nodes), lambda j, k: (k, j)),  # Lhat^T
            ],
            out_specs=pl.BlockSpec((f, tile_nodes), lambda j, k: (0, j)),
            scratch_shapes=[pltpu.VMEM((f, tile_nodes), jnp.float32)],
        ),
        compiler_params=cparams,
    )(x_bf, lhat_t)

    # Pass 2: T1^T @ Lhat^T contraction + folded output matmuls + bias + ReLU.
    out_t = pl.pallas_call(
        cheb_out_kernel,
        out_shape=jax.ShapeDtypeStruct((c_out, n_pad), jnp.float32),
        grid_spec=pltpu.PrefetchScalarGridSpec(
            num_scalar_prefetch=0,
            grid=grid,
            in_specs=[
                pl.BlockSpec((f, tile_nodes), lambda j, k: (0, k)),           # T1^T (k)
                pl.BlockSpec((tile_nodes, tile_nodes), lambda j, k: (k, j)),  # Lhat^T
                pl.BlockSpec((f, tile_nodes), lambda j, k: (0, j)),           # X^T  (j)
                pl.BlockSpec((f, tile_nodes), lambda j, k: (0, j)),           # T1^T (j)
                pl.BlockSpec((c_out, f), lambda j, k: (0, 0)),                # (W0-W2)^T
                pl.BlockSpec((c_out, f), lambda j, k: (0, 0)),                # W1^T
                pl.BlockSpec((c_out, f), lambda j, k: (0, 0)),                # 2*W2^T
                pl.BlockSpec((c_out, 1), lambda j, k: (0, 0)),                # bias
            ],
            out_specs=pl.BlockSpec((c_out, tile_nodes), lambda j, k: (0, j)),
            scratch_shapes=[pltpu.VMEM((f, tile_nodes), jnp.float32)],
        ),
        compiler_params=cparams,
    )(t1_bf, lhat_t, x_t, t1_bf, w0m2, w1t, w2x2, b2d)

    return out_t[:, :n].T  # back to [N, C]


def reference_forward(x, edge_index, weights, bias):
    """Pure-JAX reference with the same precision policy as the kernel
    (bf16 Lhat / bf16 MXU contraction operands, bf16 T1 intermediate,
    f32 accumulation and f32 epilogue)."""
    n, f = x.shape
    c_out = weights.shape[-1]
    lhat_t = build_lhat_t(edge_index, n).astype(jnp.bfloat16)
    x_t = x.astype(jnp.float32).T                                   # [F, N]
    x_bf = x_t.astype(jnp.bfloat16)
    t1_bf = jnp.dot(x_bf, lhat_t,
                    preferred_element_type=jnp.float32).astype(jnp.bfloat16)
    acc = jnp.dot(t1_bf, lhat_t, preferred_element_type=jnp.float32)
    w = weights.astype(jnp.float32)
    out_t = ((w[0] - w[2]).T @ x_t
             + w[1].T @ t1_bf.astype(jnp.float32)
             + (2.0 * w[2]).T @ acc
             + bias.astype(jnp.float32).reshape(c_out, 1))
    return jnp.maximum(out_t, 0.0).T


if __name__ == "__main__":
    # Small deterministic problem: N=200 nodes (padded to 256 internally),
    # in_features=8, out_channels=8, K=3. tile_nodes=128 -> 2x2 grid exercises
    # the tiled accumulation, padding and pipelining paths.
    N, F, C_OUT, K = 200, 8, 8, 3

    key = jax.random.PRNGKey(0)
    kx, kw = jax.random.split(key)

    # Node features.
    x = jax.random.normal(kx, (N, F), dtype=jnp.float32)

    # Undirected ring graph as edge_index [2, E] (both directions, no self-loops).
    idx = jnp.arange(N)
    src = jnp.concatenate([idx, (idx + 1) % N])
    dst = jnp.concatenate([(idx + 1) % N, idx])
    edge_index = jnp.stack([src, dst]).astype(jnp.int32)  # [2, 2N]

    # ChebConv parameters: K=3 linear layers (no per-lin bias) + shared bias.
    # init_weights(): uniform(0.0, 0.5) on every 'weight'; bias stays zero.
    weights = jax.random.uniform(kw, (K, F, C_OUT), minval=0.0, maxval=0.5,
                                 dtype=jnp.float32)
    bias = jnp.zeros((C_OUT,), dtype=jnp.float32)

    out = gcnn_block_forward(x, edge_index, weights, bias, tile_nodes=128)
    out = jax.block_until_ready(out)

    ref = reference_forward(x, edge_index, weights, bias)
    assert out.shape == (N, C_OUT)
    max_err = float(jnp.max(jnp.abs(out - ref)))
    assert jnp.allclose(out, ref, atol=2e-3, rtol=2e-3), max_err

    print("KERNEL_OK")
</pallas_src>

<mosaic_0001>
module attributes {stable_mosaic.version = 11 : i64} {
  func.func private @main(%arg0: i32) attributes {dimension_semantics = [#tpu.dimension_semantics<core_parallel>], iteration_bounds = array<i64: 2>, tpu.core_type = #tpu.core_type<sc_scalar_subcore>, window_params = []} {
    return
  }
}

module attributes {stable_mosaic.version = 11 : i64} {
  func.func private @main(%arg0: i32) attributes {dimension_semantics = [#tpu.dimension_semantics<core_parallel>], iteration_bounds = array<i64: 2>, tpu.core_type = #tpu.core_type<sc_scalar_subcore>, window_params = []} {
    return
  }
}

module attributes {stable_mosaic.version = 11 : i64} {
  func.func @cheb_out_kernel(%arg0: i32, %arg1: i32, %arg2: memref<8x128xbf16, #tpu.memory_space<vmem>>, %arg3: memref<128x128xbf16, #tpu.memory_space<vmem>>, %arg4: memref<8x128xf32, #tpu.memory_space<vmem>>, %arg5: memref<8x128xbf16, #tpu.memory_space<vmem>>, %arg6: memref<8x8xf32, #tpu.memory_space<vmem>>, %arg7: memref<8x8xf32, #tpu.memory_space<vmem>>, %arg8: memref<8x8xf32, #tpu.memory_space<vmem>>, %arg9: memref<8x1xf32, #tpu.memory_space<vmem>>, %arg10: memref<8x128xf32, #tpu.memory_space<vmem>>, %arg11: memref<8x128xf32, #tpu.memory_space<vmem>>) attributes {dimension_semantics = [#tpu.dimension_semantics<parallel>, #tpu.dimension_semantics<arbitrary>], iteration_bounds = array<i64: 2, 2>, scalar_prefetch = 0 : i64, scratch_operands = 1 : i64, tpu.core_type = #tpu.core_type<tc>, window_params = [{transform_indices = @transform_0, window_bounds = array<i64: 8, 128>}, {transform_indices = @transform_1, window_bounds = array<i64: 128, 128>}, {transform_indices = @transform_2, window_bounds = array<i64: 8, 128>}, {transform_indices = @transform_3, window_bounds = array<i64: 8, 128>}, {pipeline_mode = #tpu.pipeline_mode<synchronous>, transform_indices = @transform_4, window_bounds = array<i64: 8, 8>}, {pipeline_mode = #tpu.pipeline_mode<synchronous>, transform_indices = @transform_5, window_bounds = array<i64: 8, 8>}, {pipeline_mode = #tpu.pipeline_mode<synchronous>, transform_indices = @transform_6, window_bounds = array<i64: 8, 8>}, {pipeline_mode = #tpu.pipeline_mode<synchronous>, transform_indices = @transform_7, window_bounds = array<i64: 8, 1>}, {transform_indices = @transform_8, window_bounds = array<i64: 8, 128>}]} {
    %c0_i32 = arith.constant 0 : i32
    %0 = arith.cmpi eq, %arg1, %c0_i32 : i32
    %1 = arith.extui %0 : i1 to i32
    %c0_i32_0 = arith.constant 0 : i32
    %2 = arith.cmpi ne, %1, %c0_i32_0 : i32
    scf.if %2 {
      %cst_9 = arith.constant 0.000000e+00 : f32
      %12 = vector.broadcast %cst_9 : f32 to vector<8x128xf32>
      %c0_10 = arith.constant 0 : index
      %c0_11 = arith.constant 0 : index
      %13 = vector.load %arg11[%c0_10, %c0_11] : memref<8x128xf32, #tpu.memory_space<vmem>>, vector<8x128xf32>
      tpu.vector_store %arg11[%c0_10, %c0_11], %12 {strides = array<i32>} : memref<8x128xf32, #tpu.memory_space<vmem>>, vector<8x128xf32>,
    } else {
    }
    %c0 = arith.constant 0 : index
    %c0_1 = arith.constant 0 : index
    %3 = vector.load %arg11[%c0, %c0_1] : memref<8x128xf32, #tpu.memory_space<vmem>>, vector<8x128xf32>
    %c0_2 = arith.constant 0 : index
    %c0_3 = arith.constant 0 : index
    %4 = vector.load %arg2[%c0_2, %c0_3] : memref<8x128xbf16, #tpu.memory_space<vmem>>, vector<8x128xbf16>
    %c0_4 = arith.constant 0 : index
    %c0_5 = arith.constant 0 : index
    %5 = vector.load %arg3[%c0_4, %c0_5] : memref<128x128xbf16, #tpu.memory_space<vmem>>, vector<128x128xbf16>
    %cst = arith.constant dense<0.000000e+00> : vector<8x128xf32>
    %6 = tpu.matmul %4, %5, %cst {dimension_numbers = #tpu.dot_dimension_numbers<[1], [0], [0], [1], [0, 0, 1, 1], [], []>} : vector<8x128xbf16>, vector<128x128xbf16>, vector<8x128xf32> -> vector<8x128xf32>
    %7 = arith.addf %3, %6 : vector<8x128xf32>
    %c0_6 = arith.constant 0 : index
    %c0_7 = arith.constant 0 : index
    %8 = vector.load %arg11[%c0_6, %c0_7] : memref<8x128xf32, #tpu.memory_space<vmem>>, vector<8x128xf32>
    tpu.vector_store %arg11[%c0_6, %c0_7], %7 {strides = array<i32>} : memref<8x128xf32, #tpu.memory_space<vmem>>, vector<8x128xf32>,
    %c1_i32 = arith.constant 1 : i32
    %9 = arith.cmpi eq, %arg1, %c1_i32 : i32
    %10 = arith.extui %9 : i1 to i32
    %c0_i32_8 = arith.constant 0 : i32
    %11 = arith.cmpi ne, %10, %c0_i32_8 : i32
    scf.if %11 {
      %c0_9 = arith.constant 0 : index
      %c0_10 = arith.constant 0 : index
      %12 = vector.load %arg6[%c0_9, %c0_10] : memref<8x8xf32, #tpu.memory_space<vmem>>, vector<8x8xf32>
      %c0_11 = arith.constant 0 : index
      %c0_12 = arith.constant 0 : index
      %13 = vector.load %arg4[%c0_11, %c0_12] : memref<8x128xf32, #tpu.memory_space<vmem>>, vector<8x128xf32>
      %cst_13 = arith.constant dense<0.000000e+00> : vector<8x128xf32>
      %14 = tpu.matmul %12, %13, %cst_13 {dimension_numbers = #tpu.dot_dimension_numbers<[1], [0], [0], [1], [0, 0, 1, 1], [], []>} : vector<8x8xf32>, vector<8x128xf32>, vector<8x128xf32> -> vector<8x128xf32>
      %c0_14 = arith.constant 0 : index
      %c0_15 = arith.constant 0 : index
      %15 = vector.load %arg7[%c0_14, %c0_15] : memref<8x8xf32, #tpu.memory_space<vmem>>, vector<8x8xf32>
      %c0_16 = arith.constant 0 : index
      %c0_17 = arith.constant 0 : index
      %16 = vector.load %arg5[%c0_16, %c0_17] : memref<8x128xbf16, #tpu.memory_space<vmem>>, vector<8x128xbf16>
      %17 = arith.extf %16 : vector<8x128xbf16> to vector<8x128xf32>
      %cst_18 = arith.constant dense<0.000000e+00> : vector<8x128xf32>
      %18 = tpu.matmul %15, %17, %cst_18 {dimension_numbers = #tpu.dot_dimension_numbers<[1], [0], [0], [1], [0, 0, 1, 1], [], []>} : vector<8x8xf32>, vector<8x128xf32>, vector<8x128xf32> -> vector<8x128xf32>
      %19 = arith.addf %14, %18 : vector<8x128xf32>
      %c0_19 = arith.constant 0 : index
      %c0_20 = arith.constant 0 : index
      %20 = vector.load %arg8[%c0_19, %c0_20] : memref<8x8xf32, #tpu.memory_space<vmem>>, vector<8x8xf32>
      %c0_21 = arith.constant 0 : index
      %c0_22 = arith.constant 0 : index
      %21 = vector.load %arg11[%c0_21, %c0_22] : memref<8x128xf32, #tpu.memory_space<vmem>>, vector<8x128xf32>
      %cst_23 = arith.constant dense<0.000000e+00> : vector<8x128xf32>
      %22 = tpu.matmul %20, %21, %cst_23 {dimension_numbers = #tpu.dot_dimension_numbers<[1], [0], [0], [1], [0, 0, 1, 1], [], []>} : vector<8x8xf32>, vector<8x128xf32>, vector<8x128xf32> -> vector<8x128xf32>
      %23 = arith.addf %19, %22 : vector<8x128xf32>
      %c0_24 = arith.constant 0 : index
      %c0_25 = arith.constant 0 : index
      %24 = vector.load %arg9[%c0_24, %c0_25] : memref<8x1xf32, #tpu.memory_space<vmem>>, vector<8x1xf32>
      %25 = vector.broadcast %24 : vector<8x1xf32> to vector<8x128xf32>
      %26 = arith.addf %23, %25 : vector<8x128xf32>
      %cst_26 = arith.constant 0.000000e+00 : f32
      %27 = vector.broadcast %cst_26 : f32 to vector<8x128xf32>
      %28 = arith.maximumf %26, %27 : vector<8x128xf32>
      %c0_27 = arith.constant 0 : index
      %c0_28 = arith.constant 0 : index
      %29 = vector.load %arg10[%c0_27, %c0_28] : memref<8x128xf32, #tpu.memory_space<vmem>>, vector<8x128xf32>
      tpu.vector_store %arg10[%c0_27, %c0_28], %28 {strides = array<i32>} : memref<8x128xf32, #tpu.memory_space<vmem>>, vector<8x128xf32>,
    } else {
    }
    return
  }
  func.func @transform_0(%arg0: i32, %arg1: i32) -> (i32, i32) {
    %c0_i32 = arith.constant 0 : i32
    %c0_i32_0 = arith.constant 0 : i32
    return %c0_i32, %arg1 : i32, i32
  }
  func.func @transform_1(%arg0: i32, %arg1: i32) -> (i32, i32) {
    %c0_i32 = arith.constant 0 : i32
    return %arg1, %arg0 : i32, i32
  }
  func.func @transform_2(%arg0: i32, %arg1: i32) -> (i32, i32) {
    %c0_i32 = arith.constant 0 : i32
    %c0_i32_0 = arith.constant 0 : i32
    return %c0_i32, %arg0 : i32, i32
  }
  func.func @transform_3(%arg0: i32, %arg1: i32) -> (i32, i32) {
    %c0_i32 = arith.constant 0 : i32
    %c0_i32_0 = arith.constant 0 : i32
    return %c0_i32, %arg0 : i32, i32
  }
  func.func @transform_4(%arg0: i32, %arg1: i32) -> (i32, i32) {
    %c0_i32 = arith.constant 0 : i32
    %c0_i32_0 = arith.constant 0 : i32
    %c0_i32_1 = arith.constant 0 : i32
    return %c0_i32, %c0_i32_0 : i32, i32
  }
  func.func @transform_5(%arg0: i32, %arg1: i32) -> (i32, i32) {
    %c0_i32 = arith.constant 0 : i32
    %c0_i32_0 = arith.constant 0 : i32
    %c0_i32_1 = arith.constant 0 : i32
    return %c0_i32, %c0_i32_0 : i32, i32
  }
  func.func @transform_6(%arg0: i32, %arg1: i32) -> (i32, i32) {
    %c0_i32 = arith.constant 0 : i32
    %c0_i32_0 = arith.constant 0 : i32
    %c0_i32_1 = arith.constant 0 : i32
    return %c0_i32, %c0_i32_0 : i32, i32
  }
  func.func @transform_7(%arg0: i32, %arg1: i32) -> (i32, i32) {
    %c0_i32 = arith.constant 0 : i32
    %c0_i32_0 = arith.constant 0 : i32
    %c0_i32_1 = arith.constant 0 : i32
    return %c0_i32, %c0_i32_0 : i32, i32
  }
  func.func @transform_8(%arg0: i32, %arg1: i32) -> (i32, i32) {
    %c0_i32 = arith.constant 0 : i32
    %c0_i32_0 = arith.constant 0 : i32
    return %c0_i32, %arg0 : i32, i32
  }
}

module attributes {stable_mosaic.version = 11 : i64} {
  func.func @t1_kernel(%arg0: i32, %arg1: i32, %arg2: memref<8x128xbf16, #tpu.memory_space<vmem>>, %arg3: memref<128x128xbf16, #tpu.memory_space<vmem>>, %arg4: memref<8x128xbf16, #tpu.memory_space<vmem>>, %arg5: memref<8x128xf32, #tpu.memory_space<vmem>>) attributes {dimension_semantics = [#tpu.dimension_semantics<parallel>, #tpu.dimension_semantics<arbitrary>], iteration_bounds = array<i64: 2, 2>, scalar_prefetch = 0 : i64, scratch_operands = 1 : i64, tpu.core_type = #tpu.core_type<tc>, window_params = [{transform_indices = @transform_0, window_bounds = array<i64: 8, 128>}, {transform_indices = @transform_1, window_bounds = array<i64: 128, 128>}, {transform_indices = @transform_2, window_bounds = array<i64: 8, 128>}]} {
    %c0_i32 = arith.constant 0 : i32
    %0 = arith.cmpi eq, %arg1, %c0_i32 : i32
    %1 = arith.extui %0 : i1 to i32
    %c0_i32_0 = arith.constant 0 : i32
    %2 = arith.cmpi ne, %1, %c0_i32_0 : i32
    scf.if %2 {
      %cst_9 = arith.constant 0.000000e+00 : f32
      %12 = vector.broadcast %cst_9 : f32 to vector<8x128xf32>
      %c0_10 = arith.constant 0 : index
      %c0_11 = arith.constant 0 : index
      %13 = vector.load %arg5[%c0_10, %c0_11] : memref<8x128xf32, #tpu.memory_space<vmem>>, vector<8x128xf32>
      tpu.vector_store %arg5[%c0_10, %c0_11], %12 {strides = array<i32>} : memref<8x128xf32, #tpu.memory_space<vmem>>, vector<8x128xf32>,
    } else {
    }
    %c0 = arith.constant 0 : index
    %c0_1 = arith.constant 0 : index
    %3 = vector.load %arg5[%c0, %c0_1] : memref<8x128xf32, #tpu.memory_space<vmem>>, vector<8x128xf32>
    %c0_2 = arith.constant 0 : index
    %c0_3 = arith.constant 0 : index
    %4 = vector.load %arg2[%c0_2, %c0_3] : memref<8x128xbf16, #tpu.memory_space<vmem>>, vector<8x128xbf16>
    %c0_4 = arith.constant 0 : index
    %c0_5 = arith.constant 0 : index
    %5 = vector.load %arg3[%c0_4, %c0_5] : memref<128x128xbf16, #tpu.memory_space<vmem>>, vector<128x128xbf16>
    %cst = arith.constant dense<0.000000e+00> : vector<8x128xf32>
    %6 = tpu.matmul %4, %5, %cst {dimension_numbers = #tpu.dot_dimension_numbers<[1], [0], [0], [1], [0, 0, 1, 1], [], []>} : vector<8x128xbf16>, vector<128x128xbf16>, vector<8x128xf32> -> vector<8x128xf32>
    %7 = arith.addf %3, %6 : vector<8x128xf32>
    %c0_6 = arith.constant 0 : index
    %c0_7 = arith.constant 0 : index
    %8 = vector.load %arg5[%c0_6, %c0_7] : memref<8x128xf32, #tpu.memory_space<vmem>>, vector<8x128xf32>
    tpu.vector_store %arg5[%c0_6, %c0_7], %7 {strides = array<i32>} : memref<8x128xf32, #tpu.memory_space<vmem>>, vector<8x128xf32>,
    %c1_i32 = arith.constant 1 : i32
    %9 = arith.cmpi eq, %arg1, %c1_i32 : i32
    %10 = arith.extui %9 : i1 to i32
    %c0_i32_8 = arith.constant 0 : i32
    %11 = arith.cmpi ne, %10, %c0_i32_8 : i32
    scf.if %11 {
      %c0_9 = arith.constant 0 : index
      %c0_10 = arith.constant 0 : index
      %12 = vector.load %arg5[%c0_9, %c0_10] : memref<8x128xf32, #tpu.memory_space<vmem>>, vector<8x128xf32>
      %13 = arith.truncf %12 : vector<8x128xf32> to vector<8x128xbf16>
      %c0_11 = arith.constant 0 : index
      %c0_12 = arith.constant 0 : index
      %14 = vector.load %arg4[%c0_11, %c0_12] : memref<8x128xbf16, #tpu.memory_space<vmem>>, vector<8x128xbf16>
      tpu.vector_store %arg4[%c0_11, %c0_12], %13 {strides = array<i32>} : memref<8x128xbf16, #tpu.memory_space<vmem>>, vector<8x128xbf16>,
    } else {
    }
    return
  }
  func.func @transform_0(%arg0: i32, %arg1: i32) -> (i32, i32) {
    %c0_i32 = arith.constant 0 : i32
    %c0_i32_0 = arith.constant 0 : i32
    return %c0_i32, %arg1 : i32, i32
  }
  func.func @transform_1(%arg0: i32, %arg1: i32) -> (i32, i32) {
    %c0_i32 = arith.constant 0 : i32
    return %arg1, %arg0 : i32, i32
  }
  func.func @transform_2(%arg0: i32, %arg1: i32) -> (i32, i32) {
    %c0_i32 = arith.constant 0 : i32
    %c0_i32_0 = arith.constant 0 : i32
    return %c0_i32, %arg0 : i32, i32
  }
}

</mosaic_0001>

<llo_original>
// kernel: gcnn_block_forward.2
$region0: #{gcnn_block_forward.2}
  #allocation0 [shape = 'u32[]', space=smem, size = 0x4, offset = 0x4, fixed_abs, tag = 'smem constant byte address 0x4 - core index']
  #allocation1 [shape = 'u32[144,128]{1,0:T(1,128)}', space=vmem, size = 0x12000, scoped, tag = 'internal scratch']
  #allocation2 [shape = 'f32[8,128]{1,0:T(8,128)}', space=vmem, size = 0x1000, scoped, tag = 'scratch operand']
  %s0 = inlined_call_operand.vmem [shape: bf16[8,256], index: 0, kind: input, shape index: {}]
  %s1 = inlined_call_operand.vmem [shape: bf16[256,256], index: 1, kind: input, shape index: {}]
  %s2 = inlined_call_operand.vmem [shape: bf16[8,256], index: 2, kind: output, shape index: {}]
  %s3 = sld [smem:[#allocation0]]
  $region90: #{gcnn_block_forward.2} parent=0
    _
  %s5 = ssub.s32 1, %s3
  %s6 = scalar_select 0, %s5, %s3
  $region1: #{gcnn_block_forward.2} parent=0
    #allocation3 [shape = 'u8[65536]{0}', space=vmem, size = 0x10000, scoped, tag = 'input window, operand 1']
    loop: start=0, step=1, limit=6
    $region2: #{gcnn_block_forward.2} parent=1 // loop_pre_header
      _
    $region3: #{gcnn_block_forward.2} parent=1 // loop_header
      %s8 = sphi 0, %s12
      %p9 = scmp.ge.s32.totalorder %s8, 6
      %s15 = sphi 0, %s27
      %s16 = sphi 0, %s23
      %s17 = sphi 0, %s15
      %s18 = sphi 0, %s16
      %s19 = sphi 0, %s17
      %s20 = sphi 0, %s18
      %s30 = sphi 0, %s32
      %s33 = sphi 0, %s30
      %s34 = sphi 0, %s33
      %s50 = sphi 0, %s34
      %s58 = sphi 0, %s60
      %s61 = sphi 0, %s58
      %s62 = sphi 0, %s61
      %s78 = sphi 0, %s62
      %s84 = sphi 0, %s86
      %s87 = sphi 0, %s84
      %s88 = sphi 0, %s87
      %s104 = sphi 0, %s88
    $region4: #{gcnn_block_forward.2} parent=1 // loop_header_branch
      %11 = sbr.rel (%p9) target = $region8
    $region5: #{gcnn_block_forward.2} parent=1 // loop_body
      %s13 = ssub.s32 %s8, 1
      %s14 = ssub.s32 %s8, 2
      %s21 = sadd.s32 1, %s16
      %p22 = scmp.ge.s32.totalorder %s21, 2
      %s23 = scalar_select %p22, 0, %s21
      %s24 = sadd.s32 1, %s15
      %s25 = scalar_select %p22, %s24, %s15
      %p26 = scmp.ge.s32.totalorder %s25, 2
      %s27 = scalar_select %p26, 0, %s25
      %s28 = ssub.s32 %s16, %s23
      %p29 = scmp.eq.s32.totalorder %s28, 0
      %s31 = sadd.s32 %s30, 1
      %s32 = scalar_select %p29, %s30, %s31
      %p35 = pneg %p29
      %p36 = scmp.eq.s32.totalorder %s8, 3
      %p37 = por %p35, %p36
      %p38 = scmp.ne.s32.totalorder %s30, %s33
      %p39 = scmp.eq.s32.totalorder %s8, 0
      %p40 = por %p38, %p39
      %p41 = scmp.ne.s32.totalorder %s30, %s33
      %p42 = scmp.eq.s32.totalorder %s13, 3
      %p43 = por %p41, %p42
      %p44 = scmp.ne.s32.totalorder %s33, %s34
      %p45 = scmp.eq.s32.totalorder %s13, 0
      %p46 = por %p44, %p45
      %p47 = scmp.ne.s32.totalorder %s33, %s34
      %p48 = scmp.eq.s32.totalorder %s14, 3
      %p49 = por %p47, %p48
      %p51 = scmp.ne.s32.totalorder %s34, %s50
      %p52 = scmp.eq.s32.totalorder %s14, 0
      %p53 = por %p51, %p52
      %s54 = ssub.s32 %s16, %s23
      %s55 = ssub.s32 %s15, %s27
      %s56 = sor.u32 %s54, %s55
      %p57 = scmp.eq.s32.totalorder %s56, 0
      %s59 = sadd.s32 %s58, 1
      %s60 = scalar_select %p57, %s58, %s59
      %p63 = pneg %p57
      %p64 = scmp.eq.s32.totalorder %s8, 3
      %p65 = por %p63, %p64
      %p66 = scmp.ne.s32.totalorder %s58, %s61
      %p67 = scmp.eq.s32.totalorder %s8, 0
      %p68 = por %p66, %p67
      %p69 = scmp.ne.s32.totalorder %s58, %s61
      %p70 = scmp.eq.s32.totalorder %s13, 3
      %p71 = por %p69, %p70
      %p72 = scmp.ne.s32.totalorder %s61, %s62
      %p73 = scmp.eq.s32.totalorder %s13, 0
      %p74 = por %p72, %p73
      %p75 = scmp.ne.s32.totalorder %s61, %s62
      %p76 = scmp.eq.s32.totalorder %s14, 3
      %p77 = por %p75, %p76
      %p79 = scmp.ne.s32.totalorder %s62, %s78
      %p80 = scmp.eq.s32.totalorder %s14, 0
      %p81 = por %p79, %p80
      %s82 = ssub.s32 %s15, %s27
      %p83 = scmp.eq.s32.totalorder %s82, 0
      %s85 = sadd.s32 %s84, 1
      %s86 = scalar_select %p83, %s84, %s85
      %p89 = pneg %p83
      %p90 = scmp.eq.s32.totalorder %s8, 3
      %p91 = por %p89, %p90
      %p92 = scmp.ne.s32.totalorder %s84, %s87
      %p93 = scmp.eq.s32.totalorder %s8, 0
      %p94 = por %p92, %p93
      %p95 = scmp.ne.s32.totalorder %s84, %s87
      %p96 = scmp.eq.s32.totalorder %s13, 3
      %p97 = por %p95, %p96
      %p98 = scmp.ne.s32.totalorder %s87, %s88
      %p99 = scmp.eq.s32.totalorder %s13, 0
      %p100 = por %p98, %p99
      %p101 = scmp.ne.s32.totalorder %s87, %s88
      %p102 = scmp.eq.s32.totalorder %s14, 3
      %p103 = por %p101, %p102
      %p105 = scmp.ne.s32.totalorder %s88, %s104
      %p106 = scmp.eq.s32.totalorder %s14, 0
      %p107 = por %p105, %p106
      %p108 = scmp.le.s32.totalorder 1, %s8
      %p109 = scmp.lt.s32.totalorder %s8, 5
      %p110 = pnand %p108, %p109
      %p111 = pneg %p110
      // Predicated region
      $region9: #{gcnn_block_forward.2} parent=5 // pred_check
        _
      $region10: #{gcnn_block_forward.2} parent=5 // pred_check_branch
        %113 = sbr.rel (%p110) target = $region12
      $region11: #{gcnn_block_forward.2} parent=5 // pred_region
        %s114 = ssub.s32 %s8, 1
      $region12: #{gcnn_block_forward.2} parent=5 // pred_fallthru
        _
      %p115 = scmp.lt.s32.totalorder %s8, 4
      // Predicated region
      $region13: #{gcnn_block_forward.2} parent=5 // pred_check
        %p116 = pneg %p115
      $region14: #{gcnn_block_forward.2} parent=5 // pred_check_branch
        %118 = sbr.rel (%p116) target = $region16
      $region15: #{gcnn_block_forward.2} parent=5 // pred_region
        // Predicated region
        $region17: #{gcnn_block_forward.2} parent=15 // pred_check
          %p119 = pneg %p40
        $region18: #{gcnn_block_forward.2} parent=15 // pred_check_branch
          %121 = sbr.rel (%p119) target = $region20
        $region19: #{gcnn_block_forward.2} parent=15 // pred_region
          %p122 = scmp.lt.s32.totalorder %s16, 1
          %s123 = scalar_select %p122, %s16, 1
          %s124 = smul.addr %s123, 4
          %s125 = scalar_lea.vmem %s0, %s124
        $region20: #{gcnn_block_forward.2} parent=15 // pred_fallthru
          _
        // Predicated region
        $region21: #{gcnn_block_forward.2} parent=15 // pred_check
          %p126 = pneg %p68
        $region22: #{gcnn_block_forward.2} parent=15 // pred_check_branch
          %128 = sbr.rel (%p126) target = $region24
        $region23: #{gcnn_block_forward.2} parent=15 // pred_region
          %s129 = sand.u32 %s58, 1
          %s130 = sand.u32 %s58, 1
          %s131 = smul.addr %s130, 64
          %s132 = scalar_lea.vmem [#allocation3], %s131
          %s133 = smul.u32 16, %s16
          %s134 = smul.addr %s133, 2
          %s135 = sadd.s32 %s15, %s134
          %s136 = smul.addr %s135, 4
          %s137 = scalar_lea.vmem %s1, %s136
          // Predicated region
          $region25: #{gcnn_block_forward.2} parent=23 // pred_check
            _
          $region26: #{gcnn_block_forward.2} parent=23 // pred_check_branch
            %139 = sbr.rel (0) target = $region28
          $region27: #{gcnn_block_forward.2} parent=23 // pred_region
            // Predicated region
            $region29: #{gcnn_block_forward.2} parent=27 // pred_check
              _
            $region30: #{gcnn_block_forward.2} parent=27 // pred_check_branch
              %141 = sbr.rel target = $region32
            $region31: #{gcnn_block_forward.2} parent=27 // pred_region
              // Predicated region
              $region44: #{gcnn_block_forward.2} parent=31 // pred_check
                _
              $region45: #{gcnn_block_forward.2} parent=31 // pred_check_branch
                %186 = sbr.rel (0) target = $region47
              $region46: #{gcnn_block_forward.2} parent=31 // pred_region
                loop: start=0, step=1, limit=1
                $region48: #{gcnn_block_forward.2} parent=46 // loop_pre_header
                  _
                $region49: #{gcnn_block_forward.2} parent=46 // loop_header
                  %s188 = sphi 0, %s192
                  %p189 = scmp.ge.s32.totalorder %s188, 1
                  %s193 = sphi %s137, %s137
                  %s194 = sphi %s132, %s132
                $region50: #{gcnn_block_forward.2} parent=46 // loop_header_branch
                  %191 = sbr.rel (%p189) target = $region54
                $region51: #{gcnn_block_forward.2} parent=46 // loop_body
                  _
                $region52: #{gcnn_block_forward.2} parent=46 // loop_footer
                  %s192 = sadd.s32 1, %s188
                $region53: #{gcnn_block_forward.2} parent=46 // loop_footer_branch
                  %187 = sbr.rel target = $region49
                $region54: #{gcnn_block_forward.2} parent=46 // loop_exit
                  _
                loop: start=0, step=1, limit=1
                $region55: #{gcnn_block_forward.2} parent=46 // loop_pre_header
                  _
                $region56: #{gcnn_block_forward.2} parent=46 // loop_header
                  %s197 = sphi 0, %s201
                  %p198 = scmp.ge.s32.totalorder %s197, 1
                  %s202 = sphi %s137, %s137
                  %s203 = sphi %s132, %s132
                $region57: #{gcnn_block_forward.2} parent=46 // loop_header_branch
                  %200 = sbr.rel (%p198) target = $region61
                $region58: #{gcnn_block_forward.2} parent=46 // loop_body
                  %v204 = vld [vmem:[%s202] sm:$0xf]
                  %205 = vst [vmem:[%s203] sm:$0xf] %v204
                  %v206 = vld [vmem:[%s202 + $0x8] sm:$0xf]
                  %207 = vst [vmem:[%s203 + $0x4] sm:$0xf] %v206
                  %v208 = vld [vmem:[%s202 + $0x10] sm:$0xf]
                  %209 = vst [vmem:[%s203 + $0x8] sm:$0xf] %v208
                  %v210 = vld [vmem:[%s202 + $0x18] sm:$0xf]
                  %211 = vst [vmem:[%s203 + $0xc] sm:$0xf] %v210
                  %v212 = vld [vmem:[%s202 + $0x20] sm:$0xf]
                  %213 = vst [vmem:[%s203 + $0x10] sm:$0xf] %v212
                  %v214 = vld [vmem:[%s202 + $0x28] sm:$0xf]
                  %215 = vst [vmem:[%s203 + $0x14] sm:$0xf] %v214
                  %v216 = vld [vmem:[%s202 + $0x30] sm:$0xf]
                  %217 = vst [vmem:[%s203 + $0x18] sm:$0xf] %v216
                  %v218 = vld [vmem:[%s202 + $0x38] sm:$0xf]
                  %219 = vst [vmem:[%s203 + $0x1c] sm:$0xf] %v218
                  %v220 = vld [vmem:[%s202 + $0x40] sm:$0xf]
                  %221 = vst [vmem:[%s203 + $0x20] sm:$0xf] %v220
                  %v222 = vld [vmem:[%s202 + $0x48] sm:$0xf]
                  %223 = vst [vmem:[%s203 + $0x24] sm:$0xf] %v222
                  %v224 = vld [vmem:[%s202 + $0x50] sm:$0xf]
                  %225 = vst [vmem:[%s203 + $0x28] sm:$0xf] %v224
                  %v226 = vld [vmem:[%s202 + $0x58] sm:$0xf]
                  %227 = vst [vmem:[%s203 + $0x2c] sm:$0xf] %v226
                  %v228 = vld [vmem:[%s202 + $0x60] sm:$0xf]
                  %229 = vst [vmem:[%s203 + $0x30] sm:$0xf] %v228
                  %v230 = vld [vmem:[%s202 + $0x68] sm:$0xf]
                  %231 = vst [vmem:[%s203 + $0x34] sm:$0xf] %v230
                  %v232 = vld [vmem:[%s202 + $0x70] sm:$0xf]
                  %233 = vst [vmem:[%s203 + $0x38] sm:$0xf] %v232
                  %v234 = vld [vmem:[%s202 + $0x78] sm:$0xf]
                  %235 = vst [vmem:[%s203 + $0x3c] sm:$0xf] %v234
                $region59: #{gcnn_block_forward.2} parent=46 // loop_footer
                  %s201 = sadd.s32 1, %s197
                $region60: #{gcnn_block_forward.2} parent=46 // loop_footer_branch
                  %196 = sbr.rel target = $region56
                $region61: #{gcnn_block_forward.2} parent=46 // loop_exit
                  _
              $region47: #{gcnn_block_forward.2} parent=31 // pred_fallthru
                _
            $region32: #{gcnn_block_forward.2} parent=27 // pred_fallthru
              _
            // Predicated region
            $region33: #{gcnn_block_forward.2} parent=27 // pred_check
              _
            $region34: #{gcnn_block_forward.2} parent=27 // pred_check_branch
              %143 = sbr.rel (0) target = $region36
            $region35: #{gcnn_block_forward.2} parent=27 // pred_region
              loop: start=0, step=1, limit=1
              $region37: #{gcnn_block_forward.2} parent=35 // loop_pre_header
                _
              $region38: #{gcnn_block_forward.2} parent=35 // loop_header
                %s146 = sphi 0, %s150
                %p147 = scmp.ge.s32.totalorder %s146, 1
                %s151 = sphi %s137, %s137
                %s152 = sphi %s132, %s132
              $region39: #{gcnn_block_forward.2} parent=35 // loop_header_branch
                %149 = sbr.rel (%p147) target = $region43
              $region40: #{gcnn_block_forward.2} parent=35 // loop_body
                %v153 = vld [vmem:[%s151] sm:$0xf]
                %154 = vst [vmem:[%s152] sm:$0xf] %v153
                %v155 = vld [vmem:[%s151 + $0x8] sm:$0xf]
                %156 = vst [vmem:[%s152 + $0x4] sm:$0xf] %v155
                %v157 = vld [vmem:[%s151 + $0x10] sm:$0xf]
                %158 = vst [vmem:[%s152 + $0x8] sm:$0xf] %v157
                %v159 = vld [vmem:[%s151 + $0x18] sm:$0xf]
                %160 = vst [vmem:[%s152 + $0xc] sm:$0xf] %v159
                %v161 = vld [vmem:[%s151 + $0x20] sm:$0xf]
                %162 = vst [vmem:[%s152 + $0x10] sm:$0xf] %v161
                %v163 = vld [vmem:[%s151 + $0x28] sm:$0xf]
                %164 = vst [vmem:[%s152 + $0x14] sm:$0xf] %v163
                %v165 = vld [vmem:[%s151 + $0x30] sm:$0xf]
                %166 = vst [vmem:[%s152 + $0x18] sm:$0xf] %v165
                %v167 = vld [vmem:[%s151 + $0x38] sm:$0xf]
                %168 = vst [vmem:[%s152 + $0x1c] sm:$0xf] %v167
                %v169 = vld [vmem:[%s151 + $0x40] sm:$0xf]
                %170 = vst [vmem:[%s152 + $0x20] sm:$0xf] %v169
                %v171 = vld [vmem:[%s151 + $0x48] sm:$0xf]
                %172 = vst [vmem:[%s152 + $0x24] sm:$0xf] %v171
                %v173 = vld [vmem:[%s151 + $0x50] sm:$0xf]
                %174 = vst [vmem:[%s152 + $0x28] sm:$0xf] %v173
                %v175 = vld [vmem:[%s151 + $0x58] sm:$0xf]
                %176 = vst [vmem:[%s152 + $0x2c] sm:$0xf] %v175
                %v177 = vld [vmem:[%s151 + $0x60] sm:$0xf]
                %178 = vst [vmem:[%s152 + $0x30] sm:$0xf] %v177
                %v179 = vld [vmem:[%s151 + $0x68] sm:$0xf]
                %180 = vst [vmem:[%s152 + $0x34] sm:$0xf] %v179
                %v181 = vld [vmem:[%s151 + $0x70] sm:$0xf]
                %182 = vst [vmem:[%s152 + $0x38] sm:$0xf] %v181
                %v183 = vld [vmem:[%s151 + $0x78] sm:$0xf]
                %184 = vst [vmem:[%s152 + $0x3c] sm:$0xf] %v183
              $region41: #{gcnn_block_forward.2} parent=35 // loop_footer
                %s150 = sadd.s32 1, %s146
              $region42: #{gcnn_block_forward.2} parent=35 // loop_footer_branch
                %145 = sbr.rel target = $region38
              $region43: #{gcnn_block_forward.2} parent=35 // loop_exit
                _
            $region36: #{gcnn_block_forward.2} parent=27 // pred_fallthru
              _
          $region28: #{gcnn_block_forward.2} parent=23 // pred_fallthru
            _
          %236 = vnop
        $region24: #{gcnn_block_forward.2} parent=15 // pred_fallthru
          _
      $region16: #{gcnn_block_forward.2} parent=5 // pred_fallthru
        _
      %p237 = scmp.le.s32.totalorder 1, %s8
      %p238 = scmp.lt.s32.totalorder %s8, 5
      %p239 = pnand %p237, %p238
      %p240 = pneg %p239
      // Predicated region
      $region62: #{gcnn_block_forward.2} parent=5 // pred_check
        _
      $region63: #{gcnn_block_forward.2} parent=5 // pred_check_branch
        %242 = sbr.rel (%p239) target = $region65
      $region64: #{gcnn_block_forward.2} parent=5 // pred_region
        %s243 = ssub.s32 %s8, 1
        %s244 = sand.u32 %s61, 1
        %s245 = sand.u32 %s61, 1
        %s246 = smul.addr %s245, 64
        %s247 = scalar_lea.vmem [#allocation3], %s246
        // Predicated region
        $region66: #{gcnn_block_forward.2} parent=64 // pred_check
          %p248 = pneg %p74
        $region67: #{gcnn_block_forward.2} parent=64 // pred_check_branch
          %250 = sbr.rel (%p248) target = $region69
        $region68: #{gcnn_block_forward.2} parent=64 // pred_region
          _
        $region69: #{gcnn_block_forward.2} parent=64 // pred_fallthru
          _
        %p251 = scmp.lt.s32.totalorder %s18, 1
        %s252 = scalar_select %p251, %s18, 1
        %s253 = smul.addr %s252, 4
        %s254 = scalar_lea.vmem %s0, %s253
        %p255 = pneg %p46
        %p256 = pneg %p43
        %s257 = sand.u32 %s61, 1
        %s258 = sand.u32 %s61, 1
        %s259 = smul.addr %s258, 64
        %s260 = scalar_lea.vmem [#allocation3], %s259
        %p261 = pneg %p74
        %p262 = pneg %p71
        %p263 = pneg %p100
        %p264 = pneg %p97
        %p265 = scmp.lt.s32.totalorder %s17, 1
        %s266 = scalar_select %p265, %s17, 1
        %s267 = smul.addr %s266, 4
        %s268 = scalar_lea.vmem %s2, %s267
        %p269 = scmp.lt.s32.totalorder %s18, 1
        %s270 = scalar_select %p269, %s18, 1
        %s271 = smul.addr %s270, 4
        %s272 = scalar_lea.vmem %s0, %s271
        %s273 = smul.u32 16, %s18
        %p274 = scmp.lt.s32.totalorder %s17, 1
        %s275 = scalar_select %p274, %s17, 1
        %s276 = smul.addr %s275, 4
        %s277 = scalar_lea.vmem %s2, %s276
        %p279 = scmp.eq.s32.totalorder %s18, 0
        // Predicated region
        $region70: #{gcnn_block_forward.2} parent=64 // pred_check
          %p280 = pneg %p279
        $region71: #{gcnn_block_forward.2} parent=64 // pred_check_branch
          %282 = sbr.rel (%p280) target = $region73
        $region72: #{gcnn_block_forward.2} parent=64 // pred_region
          %283 = vst [vmem:[#allocation2] sm:$0xff] 0.0
        $region73: #{gcnn_block_forward.2} parent=64 // pred_fallthru
          _
        %v284 = vld [vmem:[#allocation2] sm:$0xff]
        %v285 = vld [vmem:[%s272] sm:$0xf]
        %v286 = vld [vmem:[%s247] sm:$0xf]
        %v287 = vld [vmem:[%s247 + $0x4] sm:$0xf]
        %v288 = vld [vmem:[%s247 + $0x8] sm:$0xf]
        %v289 = vld [vmem:[%s247 + $0xc] sm:$0xf]
        %v290 = vld [vmem:[%s247 + $0x10] sm:$0xf]
        %v291 = vld [vmem:[%s247 + $0x14] sm:$0xf]
        %v292 = vld [vmem:[%s247 + $0x18] sm:$0xf]
        %v293 = vld [vmem:[%s247 + $0x1c] sm:$0xf]
        %v294 = vld [vmem:[%s247 + $0x20] sm:$0xf]
        %v295 = vld [vmem:[%s247 + $0x24] sm:$0xf]
        %v296 = vld [vmem:[%s247 + $0x28] sm:$0xf]
        %v297 = vld [vmem:[%s247 + $0x2c] sm:$0xf]
        %v298 = vld [vmem:[%s247 + $0x30] sm:$0xf]
        %v299 = vld [vmem:[%s247 + $0x34] sm:$0xf]
        %v300 = vld [vmem:[%s247 + $0x38] sm:$0xf]
        %v301 = vld [vmem:[%s247 + $0x3c] sm:$0xf]
        %v318 = vunpack.c.l.b16 %v286
        %v319 = vunpack.c.l.b16 %v287
        %v320 = vunpack.c.l.b16 %v288
        %v321 = vunpack.c.l.b16 %v289
        %v322 = vunpack.c.l.b16 %v290
        %v323 = vunpack.c.l.b16 %v291
        %v324 = vunpack.c.l.b16 %v292
        %v325 = vunpack.c.l.b16 %v293
        %v326 = vunpack.c.l.b16 %v294
        %v327 = vunpack.c.l.b16 %v295
        %v328 = vunpack.c.l.b16 %v296
        %v329 = vunpack.c.l.b16 %v297
        %v330 = vunpack.c.l.b16 %v298
        %v331 = vunpack.c.l.b16 %v299
        %v332 = vunpack.c.l.b16 %v300
        %v333 = vunpack.c.l.b16 %v301
        %v334 = vpack.c.b16 %v319, %v318
        %v335 = vpack.c.b16 %v321, %v320
        %v336 = vpack.c.b16 %v323, %v322
        %v337 = vpack.c.b16 %v325, %v324
        %v338 = vpack.c.b16 %v327, %v326
        %v339 = vpack.c.b16 %v329, %v328
        %v340 = vpack.c.b16 %v331, %v330
        %v341 = vpack.c.b16 %v333, %v332
        %350 = vmatprep.subr.bf16.mxu0 0
        %351 = vmatpush1.bf16.msra.mxu0 %v334
        %352 = vmatprep.subr.bf16.mxu0 0
        %353 = vmatpush1.bf16.msra.mxu0 %v335
        %354 = vmatprep.subr.bf16.mxu0 0
        %355 = vmatpush1.bf16.msra.mxu0 %v336
        %356 = vmatprep.subr.bf16.mxu0 0
        %357 = vmatpush1.bf16.msra.mxu0 %v337
        %358 = vmatprep.subr.bf16.mxu0 0
        %359 = vmatpush1.bf16.msra.mxu0 %v338
        %360 = vmatprep.subr.bf16.mxu0 0
        %361 = vmatpush1.bf16.msra.mxu0 %v339
        %362 = vmatprep.subr.bf16.mxu0 0
        %363 = vmatpush1.bf16.msra.mxu0 %v340
        %364 = vmatprep.subr.bf16.mxu0 0
        %365 = vmatpush1.bf16.msra.mxu0 %v341
        %366 = vmatprep.subr.bf16.mxu0 0
        %367 = vmatpush1.bf16.msra.mxu0 0
        %368 = vmatprep.subr.bf16.mxu0 0
        %369 = vmatpush1.bf16.msra.mxu0 0
        %370 = vmatprep.subr.bf16.mxu0 0
        %371 = vmatpush1.bf16.msra.mxu0 0
        %372 = vmatprep.subr.bf16.mxu0 0
        %373 = vmatpush1.bf16.msra.mxu0 0
        %374 = vmatprep.subr.bf16.mxu0 0
        %375 = vmatpush1.bf16.msra.mxu0 0
        %376 = vmatprep.subr.bf16.mxu0 0
        %377 = vmatpush1.bf16.msra.mxu0 0
        %378 = vmatprep.subr.bf16.mxu0 0
        %379 = vmatpush1.bf16.msra.mxu0 0
        %380 = vmatprep.subr.bf16.mxu0 0
        %381 = vmatpush1.bf16.msra.mxu0 0
        %382 = vmatprep.mubr.bf16.mxu0 0
        %383 = vmatmul.mubr.bf16.gmra.mrb[0].mxu0 %v285
        %v384 = vpop.f32.mrb[0].mxu0
        %v385 = vadd.f32 0.0, %v384
        %v386 = vpop.f32.mrb[0].mxu0
        %v387 = vpop.f32.mrb[0].mxu0
        %v388 = vpop.f32.mrb[0].mxu0
        %389 = vdwg.mxu0
        %v390 = vadd.f32 %v284, %v385
        %391 = vst [vmem:[#allocation2] sm:$0xff] %v390
        %p392 = scmp.eq.s32.totalorder %s18, 1
        // Predicated region
        $region74: #{gcnn_block_forward.2} parent=64 // pred_check
          %p393 = pneg %p392
        $region75: #{gcnn_block_forward.2} parent=64 // pred_check_branch
          %395 = sbr.rel (%p393) target = $region77
        $region76: #{gcnn_block_forward.2} parent=64 // pred_region
          %v396 = vld [vmem:[#allocation2] sm:$0xff]
          %v397 = vpack.c.bf16 %v396, %v396
          %398 = vst [vmem:[%s277] sm:$0xf] %v397
        $region77: #{gcnn_block_forward.2} parent=64 // pred_fallthru
          _
        %p399 = scmp.lt.s32.totalorder %s17, 1
        %s400 = scalar_select %p399, %s17, 1
        %s401 = smul.addr %s400, 4
        %s402 = scalar_lea.vmem %s2, %s401
        // Predicated region
        $region78: #{gcnn_block_forward.2} parent=64 // pred_check
          %p403 = pneg %p97
        $region79: #{gcnn_block_forward.2} parent=64 // pred_check_branch
          %405 = sbr.rel (%p403) target = $region81
        $region80: #{gcnn_block_forward.2} parent=64 // pred_region
          _
        $region81: #{gcnn_block_forward.2} parent=64 // pred_fallthru
          _
      $region65: #{gcnn_block_forward.2} parent=5 // pred_fallthru
        _
      %p406 = scmp.le.s32.totalorder 2, %s8
      // Predicated region
      $region82: #{gcnn_block_forward.2} parent=5 // pred_check
        %p407 = pneg %p406
      $region83: #{gcnn_block_forward.2} parent=5 // pred_check_branch
        %409 = sbr.rel (%p407) target = $region85
      $region84: #{gcnn_block_forward.2} parent=5 // pred_region
        %s410 = ssub.s32 %s8, 2
        // Predicated region
        $region86: #{gcnn_block_forward.2} parent=84 // pred_check
          %p411 = pneg %p103
        $region87: #{gcnn_block_forward.2} parent=84 // pred_check_branch
          %413 = sbr.rel (%p411) target = $region89
        $region88: #{gcnn_block_forward.2} parent=84 // pred_region
          %p414 = scmp.lt.s32.totalorder %s19, 1
          %s415 = scalar_select %p414, %s19, 1
          %s416 = smul.addr %s415, 4
          %s417 = scalar_lea.vmem %s2, %s416
        $region89: #{gcnn_block_forward.2} parent=84 // pred_fallthru
          _
      $region85: #{gcnn_block_forward.2} parent=5 // pred_fallthru
        _
    $region6: #{gcnn_block_forward.2} parent=1 // loop_footer
      %s12 = sadd.s32 1, %s8
    $region7: #{gcnn_block_forward.2} parent=1 // loop_footer_branch
      %7 = sbr.rel target = $region3
    $region8: #{gcnn_block_forward.2} parent=1 // loop_exit
      _

// kernel: gcnn_block_forward.3
$region0: #{gcnn_block_forward.3}
  #allocation0 [shape = 'u32[]', space=smem, size = 0x4, offset = 0x4, fixed_abs, tag = 'smem constant byte address 0x4 - core index']
  #allocation1 [shape = 'u32[144,128]{1,0:T(1,128)}', space=vmem, size = 0x12000, scoped, tag = 'internal scratch']
  #allocation2 [shape = 'f32[8,128]{1,0:T(8,128)}', space=vmem, size = 0x1000, scoped, tag = 'scratch operand']
  %s0 = inlined_call_operand.vmem [shape: bf16[8,256], index: 0, kind: input, shape index: {}, may-alias: {0,3}]
  %s1 = inlined_call_operand.vmem [shape: bf16[256,256], index: 1, kind: input, shape index: {}]
  %s2 = inlined_call_operand.vmem [shape: f32[8,256], index: 2, kind: input, shape index: {}]
  %s3 = inlined_call_operand.vmem [shape: bf16[8,256], index: 3, kind: input, shape index: {}, may-alias: {0,3}]
  %s4 = inlined_call_operand.vmem [shape: f32[8,8], index: 4, kind: input, shape index: {}]
  %s5 = inlined_call_operand.vmem [shape: f32[8,8], index: 5, kind: input, shape index: {}]
  %s6 = inlined_call_operand.vmem [shape: f32[8,8], index: 6, kind: input, shape index: {}]
  %s7 = inlined_call_operand.vmem [shape: f32[8,1], index: 7, kind: input, shape index: {}]
  %s8 = inlined_call_operand.vmem [shape: f32[8,256], index: 8, kind: output, shape index: {}]
  %s9 = sld [smem:[#allocation0]]
  $region114: #{gcnn_block_forward.3} parent=0
    _
  %s11 = ssub.s32 1, %s9
  %s12 = scalar_select 0, %s11, %s9
  $region1: #{gcnn_block_forward.3} parent=0
    #allocation3 [shape = 'u8[65536]{0}', space=vmem, size = 0x10000, scoped, tag = 'input window, operand 1']
    loop: start=0, step=1, limit=6
    $region2: #{gcnn_block_forward.3} parent=1 // loop_pre_header
      _
    $region3: #{gcnn_block_forward.3} parent=1 // loop_header
      %s14 = sphi 0, %s18
      %p15 = scmp.ge.s32.totalorder %s14, 6
      %s21 = sphi 0, %s33
      %s22 = sphi 0, %s29
      %s23 = sphi 0, %s21
      %s24 = sphi 0, %s22
      %s25 = sphi 0, %s23
      %s26 = sphi 0, %s24
      %s36 = sphi 0, %s38
      %s39 = sphi 0, %s36
      %s40 = sphi 0, %s39
      %s56 = sphi 0, %s40
      %s64 = sphi 0, %s66
      %s67 = sphi 0, %s64
      %s68 = sphi 0, %s67
      %s84 = sphi 0, %s68
      %s90 = sphi 0, %s92
      %s93 = sphi 0, %s90
      %s94 = sphi 0, %s93
      %s110 = sphi 0, %s94
      %s116 = sphi 0, %s118
      %s119 = sphi 0, %s116
      %s120 = sphi 0, %s119
      %s136 = sphi 0, %s120
      %s140 = sphi 0, %s140
      %s142 = sphi 0, %s140
      %s143 = sphi 0, %s142
      %s157 = sphi 0, %s143
      %s161 = sphi 0, %s161
      %s163 = sphi 0, %s161
      %s164 = sphi 0, %s163
      %s178 = sphi 0, %s164
      %s182 = sphi 0, %s182
      %s184 = sphi 0, %s182
      %s185 = sphi 0, %s184
      %s199 = sphi 0, %s185
      %s203 = sphi 0, %s203
      %s205 = sphi 0, %s203
      %s206 = sphi 0, %s205
      %s220 = sphi 0, %s206
      %s226 = sphi 0, %s228
      %s229 = sphi 0, %s226
      %s230 = sphi 0, %s229
      %s246 = sphi 0, %s230
    $region4: #{gcnn_block_forward.3} parent=1 // loop_header_branch
      %17 = sbr.rel (%p15) target = $region8
    $region5: #{gcnn_block_forward.3} parent=1 // loop_body
      %s19 = ssub.s32 %s14, 1
      %s20 = ssub.s32 %s14, 2
      %s27 = sadd.s32 1, %s22
      %p28 = scmp.ge.s32.totalorder %s27, 2
      %s29 = scalar_select %p28, 0, %s27
      %s30 = sadd.s32 1, %s21
      %s31 = scalar_select %p28, %s30, %s21
      %p32 = scmp.ge.s32.totalorder %s31, 2
      %s33 = scalar_select %p32, 0, %s31
      %s34 = ssub.s32 %s22, %s29
      %p35 = scmp.eq.s32.totalorder %s34, 0
      %s37 = sadd.s32 %s36, 1
      %s38 = scalar_select %p35, %s36, %s37
      %p41 = pneg %p35
      %p42 = scmp.eq.s32.totalorder %s14, 3
      %p43 = por %p41, %p42
      %p44 = scmp.ne.s32.totalorder %s36, %s39
      %p45 = scmp.eq.s32.totalorder %s14, 0
      %p46 = por %p44, %p45
      %p47 = scmp.ne.s32.totalorder %s36, %s39
      %p48 = scmp.eq.s32.totalorder %s19, 3
      %p49 = por %p47, %p48
      %p50 = scmp.ne.s32.totalorder %s39, %s40
      %p51 = scmp.eq.s32.totalorder %s19, 0
      %p52 = por %p50, %p51
      %p53 = scmp.ne.s32.totalorder %s39, %s40
      %p54 = scmp.eq.s32.totalorder %s20, 3
      %p55 = por %p53, %p54
      %p57 = scmp.ne.s32.totalorder %s40, %s56
      %p58 = scmp.eq.s32.totalorder %s20, 0
      %p59 = por %p57, %p58
      %s60 = ssub.s32 %s22, %s29
      %s61 = ssub.s32 %s21, %s33
      %s62 = sor.u32 %s60, %s61
      %p63 = scmp.eq.s32.totalorder %s62, 0
      %s65 = sadd.s32 %s64, 1
      %s66 = scalar_select %p63, %s64, %s65
      %p69 = pneg %p63
      %p70 = scmp.eq.s32.totalorder %s14, 3
      %p71 = por %p69, %p70
      %p72 = scmp.ne.s32.totalorder %s64, %s67
      %p73 = scmp.eq.s32.totalorder %s14, 0
      %p74 = por %p72, %p73
      %p75 = scmp.ne.s32.totalorder %s64, %s67
      %p76 = scmp.eq.s32.totalorder %s19, 3
      %p77 = por %p75, %p76
      %p78 = scmp.ne.s32.totalorder %s67, %s68
      %p79 = scmp.eq.s32.totalorder %s19, 0
      %p80 = por %p78, %p79
      %p81 = scmp.ne.s32.totalorder %s67, %s68
      %p82 = scmp.eq.s32.totalorder %s20, 3
      %p83 = por %p81, %p82
      %p85 = scmp.ne.s32.totalorder %s68, %s84
      %p86 = scmp.eq.s32.totalorder %s20, 0
      %p87 = por %p85, %p86
      %s88 = ssub.s32 %s21, %s33
      %p89 = scmp.eq.s32.totalorder %s88, 0
      %s91 = sadd.s32 %s90, 1
      %s92 = scalar_select %p89, %s90, %s91
      %p95 = pneg %p89
      %p96 = scmp.eq.s32.totalorder %s14, 3
      %p97 = por %p95, %p96
      %p98 = scmp.ne.s32.totalorder %s90, %s93
      %p99 = scmp.eq.s32.totalorder %s14, 0
      %p100 = por %p98, %p99
      %p101 = scmp.ne.s32.totalorder %s90, %s93
      %p102 = scmp.eq.s32.totalorder %s19, 3
      %p103 = por %p101, %p102
      %p104 = scmp.ne.s32.totalorder %s93, %s94
      %p105 = scmp.eq.s32.totalorder %s19, 0
      %p106 = por %p104, %p105
      %p107 = scmp.ne.s32.totalorder %s93, %s94
      %p108 = scmp.eq.s32.totalorder %s20, 3
      %p109 = por %p107, %p108
      %p111 = scmp.ne.s32.totalorder %s94, %s110
      %p112 = scmp.eq.s32.totalorder %s20, 0
      %p113 = por %p111, %p112
      %s114 = ssub.s32 %s21, %s33
      %p115 = scmp.eq.s32.totalorder %s114, 0
      %s117 = sadd.s32 %s116, 1
      %s118 = scalar_select %p115, %s116, %s117
      %p121 = pneg %p115
      %p122 = scmp.eq.s32.totalorder %s14, 3
      %p123 = por %p121, %p122
      %p124 = scmp.ne.s32.totalorder %s116, %s119
      %p125 = scmp.eq.s32.totalorder %s14, 0
      %p126 = por %p124, %p125
      %p127 = scmp.ne.s32.totalorder %s116, %s119
      %p128 = scmp.eq.s32.totalorder %s19, 3
      %p129 = por %p127, %p128
      %p130 = scmp.ne.s32.totalorder %s119, %s120
      %p131 = scmp.eq.s32.totalorder %s19, 0
      %p132 = por %p130, %p131
      %p133 = scmp.ne.s32.totalorder %s119, %s120
      %p134 = scmp.eq.s32.totalorder %s20, 3
      %p135 = por %p133, %p134
      %p137 = scmp.ne.s32.totalorder %s120, %s136
      %p138 = scmp.eq.s32.totalorder %s20, 0
      %p139 = por %p137, %p138
      %s141 = sadd.s32 %s140, 1
      %p144 = scmp.eq.s32.totalorder %s14, 3
      %p145 = scmp.ne.s32.totalorder %s140, %s142
      %p146 = scmp.eq.s32.totalorder %s14, 0
      %p147 = por %p145, %p146
      %p148 = scmp.ne.s32.totalorder %s140, %s142
      %p149 = scmp.eq.s32.totalorder %s19, 3
      %p150 = por %p148, %p149
      %p151 = scmp.ne.s32.totalorder %s142, %s143
      %p152 = scmp.eq.s32.totalorder %s19, 0
      %p153 = por %p151, %p152
      %p154 = scmp.ne.s32.totalorder %s142, %s143
      %p155 = scmp.eq.s32.totalorder %s20, 3
      %p156 = por %p154, %p155
      %p158 = scmp.ne.s32.totalorder %s143, %s157
      %p159 = scmp.eq.s32.totalorder %s20, 0
      %p160 = por %p158, %p159
      %s162 = sadd.s32 %s161, 1
      %p165 = scmp.eq.s32.totalorder %s14, 3
      %p166 = scmp.ne.s32.totalorder %s161, %s163
      %p167 = scmp.eq.s32.totalorder %s14, 0
      %p168 = por %p166, %p167
      %p169 = scmp.ne.s32.totalorder %s161, %s163
      %p170 = scmp.eq.s32.totalorder %s19, 3
      %p171 = por %p169, %p170
      %p172 = scmp.ne.s32.totalorder %s163, %s164
      %p173 = scmp.eq.s32.totalorder %s19, 0
      %p174 = por %p172, %p173
      %p175 = scmp.ne.s32.totalorder %s163, %s164
      %p176 = scmp.eq.s32.totalorder %s20, 3
      %p177 = por %p175, %p176
      %p179 = scmp.ne.s32.totalorder %s164, %s178
      %p180 = scmp.eq.s32.totalorder %s20, 0
      %p181 = por %p179, %p180
      %s183 = sadd.s32 %s182, 1
      %p186 = scmp.eq.s32.totalorder %s14, 3
      %p187 = scmp.ne.s32.totalorder %s182, %s184
      %p188 = scmp.eq.s32.totalorder %s14, 0
      %p189 = por %p187, %p188
      %p190 = scmp.ne.s32.totalorder %s182, %s184
      %p191 = scmp.eq.s32.totalorder %s19, 3
      %p192 = por %p190, %p191
      %p193 = scmp.ne.s32.totalorder %s184, %s185
      %p194 = scmp.eq.s32.totalorder %s19, 0
      %p195 = por %p193, %p194
      %p196 = scmp.ne.s32.totalorder %s184, %s185
      %p197 = scmp.eq.s32.totalorder %s20, 3
      %p198 = por %p196, %p197
      %p200 = scmp.ne.s32.totalorder %s185, %s199
      %p201 = scmp.eq.s32.totalorder %s20, 0
      %p202 = por %p200, %p201
      %s204 = sadd.s32 %s203, 1
      %p207 = scmp.eq.s32.totalorder %s14, 3
      %p208 = scmp.ne.s32.totalorder %s203, %s205
      %p209 = scmp.eq.s32.totalorder %s14, 0
      %p210 = por %p208, %p209
      %p211 = scmp.ne.s32.totalorder %s203, %s205
      %p212 = scmp.eq.s32.totalorder %s19, 3
      %p213 = por %p211, %p212
      %p214 = scmp.ne.s32.totalorder %s205, %s206
      %p215 = scmp.eq.s32.totalorder %s19, 0
      %p216 = por %p214, %p215
      %p217 = scmp.ne.s32.totalorder %s205, %s206
      %p218 = scmp.eq.s32.totalorder %s20, 3
      %p219 = por %p217, %p218
      %p221 = scmp.ne.s32.totalorder %s206, %s220
      %p222 = scmp.eq.s32.totalorder %s20, 0
      %p223 = por %p221, %p222
      %s224 = ssub.s32 %s21, %s33
      %p225 = scmp.eq.s32.totalorder %s224, 0
      %s227 = sadd.s32 %s226, 1
      %s228 = scalar_select %p225, %s226, %s227
      %p231 = pneg %p225
      %p232 = scmp.eq.s32.totalorder %s14, 3
      %p233 = por %p231, %p232
      %p234 = scmp.ne.s32.totalorder %s226, %s229
      %p235 = scmp.eq.s32.totalorder %s14, 0
      %p236 = por %p234, %p235
      %p237 = scmp.ne.s32.totalorder %s226, %s229
      %p238 = scmp.eq.s32.totalorder %s19, 3
      %p239 = por %p237, %p238
      %p240 = scmp.ne.s32.totalorder %s229, %s230
      %p241 = scmp.eq.s32.totalorder %s19, 0
      %p242 = por %p240, %p241
      %p243 = scmp.ne.s32.totalorder %s229, %s230
      %p244 = scmp.eq.s32.totalorder %s20, 3
      %p245 = por %p243, %p244
      %p247 = scmp.ne.s32.totalorder %s230, %s246
      %p248 = scmp.eq.s32.totalorder %s20, 0
      %p249 = por %p247, %p248
      %p250 = scmp.le.s32.totalorder 1, %s14
      %p251 = scmp.lt.s32.totalorder %s14, 5
      %p252 = pnand %p250, %p251
      %p253 = pneg %p252
      // Predicated region
      $region9: #{gcnn_block_forward.3} parent=5 // pred_check
        _
      $region10: #{gcnn_block_forward.3} parent=5 // pred_check_branch
        %255 = sbr.rel (%p252) target = $region12
      $region11: #{gcnn_block_forward.3} parent=5 // pred_region
        %s256 = ssub.s32 %s14, 1
        // Predicated region
        $region13: #{gcnn_block_forward.3} parent=11 // pred_check
          %p257 = pneg %p153
        $region14: #{gcnn_block_forward.3} parent=11 // pred_check_branch
          %259 = sbr.rel (%p257) target = $region16
        $region15: #{gcnn_block_forward.3} parent=11 // pred_region
          _
        $region16: #{gcnn_block_forward.3} parent=11 // pred_fallthru
          _
        // Predicated region
        $region17: #{gcnn_block_forward.3} parent=11 // pred_check
          %p260 = pneg %p174
        $region18: #{gcnn_block_forward.3} parent=11 // pred_check_branch
          %262 = sbr.rel (%p260) target = $region20
        $region19: #{gcnn_block_forward.3} parent=11 // pred_region
          _
        $region20: #{gcnn_block_forward.3} parent=11 // pred_fallthru
          _
        // Predicated region
        $region21: #{gcnn_block_forward.3} parent=11 // pred_check
          %p263 = pneg %p195
        $region22: #{gcnn_block_forward.3} parent=11 // pred_check_branch
          %265 = sbr.rel (%p263) target = $region24
        $region23: #{gcnn_block_forward.3} parent=11 // pred_region
          _
        $region24: #{gcnn_block_forward.3} parent=11 // pred_fallthru
          _
        // Predicated region
        $region25: #{gcnn_block_forward.3} parent=11 // pred_check
          %p266 = pneg %p216
        $region26: #{gcnn_block_forward.3} parent=11 // pred_check_branch
          %268 = sbr.rel (%p266) target = $region28
        $region27: #{gcnn_block_forward.3} parent=11 // pred_region
          _
        $region28: #{gcnn_block_forward.3} parent=11 // pred_fallthru
          _
      $region12: #{gcnn_block_forward.3} parent=5 // pred_fallthru
        _
      %p269 = scmp.lt.s32.totalorder %s14, 4
      // Predicated region
      $region29: #{gcnn_block_forward.3} parent=5 // pred_check
        %p270 = pneg %p269
      $region30: #{gcnn_block_forward.3} parent=5 // pred_check_branch
        %272 = sbr.rel (%p270) target = $region32
      $region31: #{gcnn_block_forward.3} parent=5 // pred_region
        // Predicated region
        $region33: #{gcnn_block_forward.3} parent=31 // pred_check
          %p273 = pneg %p46
        $region34: #{gcnn_block_forward.3} parent=31 // pred_check_branch
          %275 = sbr.rel (%p273) target = $region36
        $region35: #{gcnn_block_forward.3} parent=31 // pred_region
          %p276 = scmp.lt.s32.totalorder %s22, 1
          %s277 = scalar_select %p276, %s22, 1
          %s278 = smul.addr %s277, 4
          %s279 = scalar_lea.vmem %s0, %s278
        $region36: #{gcnn_block_forward.3} parent=31 // pred_fallthru
          _
        // Predicated region
        $region37: #{gcnn_block_forward.3} parent=31 // pred_check
          %p280 = pneg %p74
        $region38: #{gcnn_block_forward.3} parent=31 // pred_check_branch
          %282 = sbr.rel (%p280) target = $region40
        $region39: #{gcnn_block_forward.3} parent=31 // pred_region
          %s283 = sand.u32 %s64, 1
          %s284 = sand.u32 %s64, 1
          %s285 = smul.addr %s284, 64
          %s286 = scalar_lea.vmem [#allocation3], %s285
          %s287 = smul.u32 16, %s22
          %s288 = smul.addr %s287, 2
          %s289 = sadd.s32 %s21, %s288
          %s290 = smul.addr %s289, 4
          %s291 = scalar_lea.vmem %s1, %s290
          // Predicated region
          $region41: #{gcnn_block_forward.3} parent=39 // pred_check
            _
          $region42: #{gcnn_block_forward.3} parent=39 // pred_check_branch
            %293 = sbr.rel (0) target = $region44
          $region43: #{gcnn_block_forward.3} parent=39 // pred_region
            // Predicated region
            $region45: #{gcnn_block_forward.3} parent=43 // pred_check
              _
            $region46: #{gcnn_block_forward.3} parent=43 // pred_check_branch
              %295 = sbr.rel target = $region48
            $region47: #{gcnn_block_forward.3} parent=43 // pred_region
              // Predicated region
              $region60: #{gcnn_block_forward.3} parent=47 // pred_check
                _
              $region61: #{gcnn_block_forward.3} parent=47 // pred_check_branch
                %340 = sbr.rel (0) target = $region63
              $region62: #{gcnn_block_forward.3} parent=47 // pred_region
                loop: start=0, step=1, limit=1
                $region64: #{gcnn_block_forward.3} parent=62 // loop_pre_header
                  _
                $region65: #{gcnn_block_forward.3} parent=62 // loop_header
                  %s342 = sphi 0, %s346
                  %p343 = scmp.ge.s32.totalorder %s342, 1
                  %s347 = sphi %s291, %s291
                  %s348 = sphi %s286, %s286
                $region66: #{gcnn_block_forward.3} parent=62 // loop_header_branch
                  %345 = sbr.rel (%p343) target = $region70
                $region67: #{gcnn_block_forward.3} parent=62 // loop_body
                  _
                $region68: #{gcnn_block_forward.3} parent=62 // loop_footer
                  %s346 = sadd.s32 1, %s342
                $region69: #{gcnn_block_forward.3} parent=62 // loop_footer_branch
                  %341 = sbr.rel target = $region65
                $region70: #{gcnn_block_forward.3} parent=62 // loop_exit
                  _
                loop: start=0, step=1, limit=1
                $region71: #{gcnn_block_forward.3} parent=62 // loop_pre_header
                  _
                $region72: #{gcnn_block_forward.3} parent=62 // loop_header
                  %s351 = sphi 0, %s355
                  %p352 = scmp.ge.s32.totalorder %s351, 1
                  %s356 = sphi %s291, %s291
                  %s357 = sphi %s286, %s286
                $region73: #{gcnn_block_forward.3} parent=62 // loop_header_branch
                  %354 = sbr.rel (%p352) target = $region77
                $region74: #{gcnn_block_forward.3} parent=62 // loop_body
                  %v358 = vld [vmem:[%s356] sm:$0xf]
                  %359 = vst [vmem:[%s357] sm:$0xf] %v358
                  %v360 = vld [vmem:[%s356 + $0x8] sm:$0xf]
                  %361 = vst [vmem:[%s357 + $0x4] sm:$0xf] %v360
                  %v362 = vld [vmem:[%s356 + $0x10] sm:$0xf]
                  %363 = vst [vmem:[%s357 + $0x8] sm:$0xf] %v362
                  %v364 = vld [vmem:[%s356 + $0x18] sm:$0xf]
                  %365 = vst [vmem:[%s357 + $0xc] sm:$0xf] %v364
                  %v366 = vld [vmem:[%s356 + $0x20] sm:$0xf]
                  %367 = vst [vmem:[%s357 + $0x10] sm:$0xf] %v366
                  %v368 = vld [vmem:[%s356 + $0x28] sm:$0xf]
                  %369 = vst [vmem:[%s357 + $0x14] sm:$0xf] %v368
                  %v370 = vld [vmem:[%s356 + $0x30] sm:$0xf]
                  %371 = vst [vmem:[%s357 + $0x18] sm:$0xf] %v370
                  %v372 = vld [vmem:[%s356 + $0x38] sm:$0xf]
                  %373 = vst [vmem:[%s357 + $0x1c] sm:$0xf] %v372
                  %v374 = vld [vmem:[%s356 + $0x40] sm:$0xf]
                  %375 = vst [vmem:[%s357 + $0x20] sm:$0xf] %v374
                  %v376 = vld [vmem:[%s356 + $0x48] sm:$0xf]
                  %377 = vst [vmem:[%s357 + $0x24] sm:$0xf] %v376
                  %v378 = vld [vmem:[%s356 + $0x50] sm:$0xf]
                  %379 = vst [vmem:[%s357 + $0x28] sm:$0xf] %v378
                  %v380 = vld [vmem:[%s356 + $0x58] sm:$0xf]
                  %381 = vst [vmem:[%s357 + $0x2c] sm:$0xf] %v380
                  %v382 = vld [vmem:[%s356 + $0x60] sm:$0xf]
                  %383 = vst [vmem:[%s357 + $0x30] sm:$0xf] %v382
                  %v384 = vld [vmem:[%s356 + $0x68] sm:$0xf]
                  %385 = vst [vmem:[%s357 + $0x34] sm:$0xf] %v384
                  %v386 = vld [vmem:[%s356 + $0x70] sm:$0xf]
                  %387 = vst [vmem:[%s357 + $0x38] sm:$0xf] %v386
                  %v388 = vld [vmem:[%s356 + $0x78] sm:$0xf]
                  %389 = vst [vmem:[%s357 + $0x3c] sm:$0xf] %v388
                $region75: #{gcnn_block_forward.3} parent=62 // loop_footer
                  %s355 = sadd.s32 1, %s351
                $region76: #{gcnn_block_forward.3} parent=62 // loop_footer_branch
                  %350 = sbr.rel target = $region72
                $region77: #{gcnn_block_forward.3} parent=62 // loop_exit
                  _
              $region63: #{gcnn_block_forward.3} parent=47 // pred_fallthru
                _
            $region48: #{gcnn_block_forward.3} parent=43 // pred_fallthru
              _
            // Predicated region
            $region49: #{gcnn_block_forward.3} parent=43 // pred_check
              _
            $region50: #{gcnn_block_forward.3} parent=43 // pred_check_branch
              %297 = sbr.rel (0) target = $region52
            $region51: #{gcnn_block_forward.3} parent=43 // pred_region
              loop: start=0, step=1, limit=1
              $region53: #{gcnn_block_forward.3} parent=51 // loop_pre_header
                _
              $region54: #{gcnn_block_forward.3} parent=51 // loop_header
                %s300 = sphi 0, %s304
                %p301 = scmp.ge.s32.totalorder %s300, 1
                %s305 = sphi %s291, %s291
                %s306 = sphi %s286, %s286
              $region55: #{gcnn_block_forward.3} parent=51 // loop_header_branch
                %303 = sbr.rel (%p301) target = $region59
              $region56: #{gcnn_block_forward.3} parent=51 // loop_body
                %v307 = vld [vmem:[%s305] sm:$0xf]
                %308 = vst [vmem:[%s306] sm:$0xf] %v307
                %v309 = vld [vmem:[%s305 + $0x8] sm:$0xf]
                %310 = vst [vmem:[%s306 + $0x4] sm:$0xf] %v309
                %v311 = vld [vmem:[%s305 + $0x10] sm:$0xf]
                %312 = vst [vmem:[%s306 + $0x8] sm:$0xf] %v311
                %v313 = vld [vmem:[%s305 + $0x18] sm:$0xf]
                %314 = vst [vmem:[%s306 + $0xc] sm:$0xf] %v313
                %v315 = vld [vmem:[%s305 + $0x20] sm:$0xf]
                %316 = vst [vmem:[%s306 + $0x10] sm:$0xf] %v315
                %v317 = vld [vmem:[%s305 + $0x28] sm:$0xf]
                %318 = vst [vmem:[%s306 + $0x14] sm:$0xf] %v317
                %v319 = vld [vmem:[%s305 + $0x30] sm:$0xf]
                %320 = vst [vmem:[%s306 + $0x18] sm:$0xf] %v319
                %v321 = vld [vmem:[%s305 + $0x38] sm:$0xf]
                %322 = vst [vmem:[%s306 + $0x1c] sm:$0xf] %v321
                %v323 = vld [vmem:[%s305 + $0x40] sm:$0xf]
                %324 = vst [vmem:[%s306 + $0x20] sm:$0xf] %v323
                %v325 = vld [vmem:[%s305 + $0x48] sm:$0xf]
                %326 = vst [vmem:[%s306 + $0x24] sm:$0xf] %v325
                %v327 = vld [vmem:[%s305 + $0x50] sm:$0xf]
                %328 = vst [vmem:[%s306 + $0x28] sm:$0xf] %v327
                %v329 = vld [vmem:[%s305 + $0x58] sm:$0xf]
                %330 = vst [vmem:[%s306 + $0x2c] sm:$0xf] %v329
                %v331 = vld [vmem:[%s305 + $0x60] sm:$0xf]
                %332 = vst [vmem:[%s306 + $0x30] sm:$0xf] %v331
                %v333 = vld [vmem:[%s305 + $0x68] sm:$0xf]
                %334 = vst [vmem:[%s306 + $0x34] sm:$0xf] %v333
                %v335 = vld [vmem:[%s305 + $0x70] sm:$0xf]
                %336 = vst [vmem:[%s306 + $0x38] sm:$0xf] %v335
                %v337 = vld [vmem:[%s305 + $0x78] sm:$0xf]
                %338 = vst [vmem:[%s306 + $0x3c] sm:$0xf] %v337
              $region57: #{gcnn_block_forward.3} parent=51 // loop_footer
                %s304 = sadd.s32 1, %s300
              $region58: #{gcnn_block_forward.3} parent=51 // loop_footer_branch
                %299 = sbr.rel target = $region54
              $region59: #{gcnn_block_forward.3} parent=51 // loop_exit
                _
            $region52: #{gcnn_block_forward.3} parent=43 // pred_fallthru
              _
          $region44: #{gcnn_block_forward.3} parent=39 // pred_fallthru
            _
          %390 = vnop
        $region40: #{gcnn_block_forward.3} parent=31 // pred_fallthru
          _
        // Predicated region
        $region78: #{gcnn_block_forward.3} parent=31 // pred_check
          %p391 = pneg %p100
        $region79: #{gcnn_block_forward.3} parent=31 // pred_check_branch
          %393 = sbr.rel (%p391) target = $region81
        $region80: #{gcnn_block_forward.3} parent=31 // pred_region
          %p394 = scmp.lt.s32.totalorder %s21, 1
          %s395 = scalar_select %p394, %s21, 1
          %s396 = smul.addr %s395, 8
          %s397 = scalar_lea.vmem %s2, %s396
        $region81: #{gcnn_block_forward.3} parent=31 // pred_fallthru
          _
        // Predicated region
        $region82: #{gcnn_block_forward.3} parent=31 // pred_check
          %p398 = pneg %p126
        $region83: #{gcnn_block_forward.3} parent=31 // pred_check_branch
          %400 = sbr.rel (%p398) target = $region85
        $region84: #{gcnn_block_forward.3} parent=31 // pred_region
          %p401 = scmp.lt.s32.totalorder %s21, 1
          %s402 = scalar_select %p401, %s21, 1
          %s403 = smul.addr %s402, 4
          %s404 = scalar_lea.vmem %s3, %s403
        $region85: #{gcnn_block_forward.3} parent=31 // pred_fallthru
          _
      $region32: #{gcnn_block_forward.3} parent=5 // pred_fallthru
        _
      %p405 = scmp.le.s32.totalorder 1, %s14
      %p406 = scmp.lt.s32.totalorder %s14, 5
      %p407 = pnand %p405, %p406
      %p408 = pneg %p407
      // Predicated region
      $region86: #{gcnn_block_forward.3} parent=5 // pred_check
        _
      $region87: #{gcnn_block_forward.3} parent=5 // pred_check_branch
        %410 = sbr.rel (%p407) target = $region89
      $region88: #{gcnn_block_forward.3} parent=5 // pred_region
        %s411 = ssub.s32 %s14, 1
        %s412 = sand.u32 %s67, 1
        %s413 = sand.u32 %s67, 1
        %s414 = smul.addr %s413, 64
        %s415 = scalar_lea.vmem [#allocation3], %s414
        // Predicated region
        $region90: #{gcnn_block_forward.3} parent=88 // pred_check
          %p416 = pneg %p80
        $region91: #{gcnn_block_forward.3} parent=88 // pred_check_branch
          %418 = sbr.rel (%p416) target = $region93
        $region92: #{gcnn_block_forward.3} parent=88 // pred_region
          _
        $region93: #{gcnn_block_forward.3} parent=88 // pred_fallthru
          _
        %p419 = scmp.lt.s32.totalorder %s24, 1
        %s420 = scalar_select %p419, %s24, 1
        %s421 = smul.addr %s420, 4
        %s422 = scalar_lea.vmem %s0, %s421
        %p423 = pneg %p52
        %p424 = pneg %p49
        %s425 = sand.u32 %s67, 1
        %s426 = sand.u32 %s67, 1
        %s427 = smul.addr %s426, 64
        %s428 = scalar_lea.vmem [#allocation3], %s427
        %p429 = pneg %p80
        %p430 = pneg %p77
        %p431 = scmp.lt.s32.totalorder %s23, 1
        %s432 = scalar_select %p431, %s23, 1
        %s433 = smul.addr %s432, 8
        %s434 = scalar_lea.vmem %s2, %s433
        %p435 = pneg %p106
        %p436 = pneg %p103
        %p437 = scmp.lt.s32.totalorder %s23, 1
        %s438 = scalar_select %p437, %s23, 1
        %s439 = smul.addr %s438, 4
        %s440 = scalar_lea.vmem %s3, %s439
        %p441 = pneg %p132
        %p442 = pneg %p129
        %p443 = pneg %p153
        %p444 = pneg %p150
        %p445 = pneg %p174
        %p446 = pneg %p171
        %p447 = pneg %p195
        %p448 = pneg %p192
        %p449 = pneg %p216
        %p450 = pneg %p213
        %p451 = pneg %p242
        %p452 = pneg %p239
        %p453 = scmp.lt.s32.totalorder %s23, 1
        %s454 = scalar_select %p453, %s23, 1
        %s455 = smul.addr %s454, 8
        %s456 = scalar_lea.vmem %s8, %s455
        %p457 = scmp.lt.s32.totalorder %s24, 1
        %s458 = scalar_select %p457, %s24, 1
        %s459 = smul.addr %s458, 4
        %s460 = scalar_lea.vmem %s0, %s459
        %s461 = smul.u32 16, %s24
        %p462 = scmp.lt.s32.totalorder %s23, 1
        %s463 = scalar_select %p462, %s23, 1
        %s464 = smul.addr %s463, 8
        %s465 = scalar_lea.vmem %s2, %s464
        %p466 = scmp.lt.s32.totalorder %s23, 1
        %s467 = scalar_select %p466, %s23, 1
        %s468 = smul.addr %s467, 4
        %s469 = scalar_lea.vmem %s3, %s468
        %p470 = scmp.lt.s32.totalorder %s23, 1
        %s471 = scalar_select %p470, %s23, 1
        %s472 = smul.addr %s471, 8
        %s473 = scalar_lea.vmem %s8, %s472
        %p475 = scmp.eq.s32.totalorder %s24, 0
        // Predicated region
        $region94: #{gcnn_block_forward.3} parent=88 // pred_check
          %p476 = pneg %p475
        $region95: #{gcnn_block_forward.3} parent=88 // pred_check_branch
          %478 = sbr.rel (%p476) target = $region97
        $region96: #{gcnn_block_forward.3} parent=88 // pred_region
          %479 = vst [vmem:[#allocation2] sm:$0xff] 0.0
        $region97: #{gcnn_block_forward.3} parent=88 // pred_fallthru
          _
        %v480 = vld [vmem:[#allocation2] sm:$0xff]
        %v481 = vld [vmem:[%s460] sm:$0xf]
        %v482 = vld [vmem:[%s415] sm:$0xf]
        %v483 = vld [vmem:[%s415 + $0x4] sm:$0xf]
        %v484 = vld [vmem:[%s415 + $0x8] sm:$0xf]
        %v485 = vld [vmem:[%s415 + $0xc] sm:$0xf]
        %v486 = vld [vmem:[%s415 + $0x10] sm:$0xf]
        %v487 = vld [vmem:[%s415 + $0x14] sm:$0xf]
        %v488 = vld [vmem:[%s415 + $0x18] sm:$0xf]
        %v489 = vld [vmem:[%s415 + $0x1c] sm:$0xf]
        %v490 = vld [vmem:[%s415 + $0x20] sm:$0xf]
        %v491 = vld [vmem:[%s415 + $0x24] sm:$0xf]
        %v492 = vld [vmem:[%s415 + $0x28] sm:$0xf]
        %v493 = vld [vmem:[%s415 + $0x2c] sm:$0xf]
        %v494 = vld [vmem:[%s415 + $0x30] sm:$0xf]
        %v495 = vld [vmem:[%s415 + $0x34] sm:$0xf]
        %v496 = vld [vmem:[%s415 + $0x38] sm:$0xf]
        %v497 = vld [vmem:[%s415 + $0x3c] sm:$0xf]
        %v514 = vunpack.c.l.b16 %v482
        %v515 = vunpack.c.l.b16 %v483
        %v516 = vunpack.c.l.b16 %v484
        %v517 = vunpack.c.l.b16 %v485
        %v518 = vunpack.c.l.b16 %v486
        %v519 = vunpack.c.l.b16 %v487
        %v520 = vunpack.c.l.b16 %v488
        %v521 = vunpack.c.l.b16 %v489
        %v522 = vunpack.c.l.b16 %v490
        %v523 = vunpack.c.l.b16 %v491
        %v524 = vunpack.c.l.b16 %v492
        %v525 = vunpack.c.l.b16 %v493
        %v526 = vunpack.c.l.b16 %v494
        %v527 = vunpack.c.l.b16 %v495
        %v528 = vunpack.c.l.b16 %v496
        %v529 = vunpack.c.l.b16 %v497
        %v530 = vpack.c.b16 %v515, %v514
        %v531 = vpack.c.b16 %v517, %v516
        %v532 = vpack.c.b16 %v519, %v518
        %v533 = vpack.c.b16 %v521, %v520
        %v534 = vpack.c.b16 %v523, %v522
        %v535 = vpack.c.b16 %v525, %v524
        %v536 = vpack.c.b16 %v527, %v526
        %v537 = vpack.c.b16 %v529, %v528
        %546 = vmatprep.subr.bf16.mxu0 0
        %547 = vmatpush1.bf16.msra.mxu0 %v530
        %548 = vmatprep.subr.bf16.mxu0 0
        %549 = vmatpush1.bf16.msra.mxu0 %v531
        %550 = vmatprep.subr.bf16.mxu0 0
        %551 = vmatpush1.bf16.msra.mxu0 %v532
        %552 = vmatprep.subr.bf16.mxu0 0
        %553 = vmatpush1.bf16.msra.mxu0 %v533
        %554 = vmatprep.subr.bf16.mxu0 0
        %555 = vmatpush1.bf16.msra.mxu0 %v534
        %556 = vmatprep.subr.bf16.mxu0 0
        %557 = vmatpush1.bf16.msra.mxu0 %v535
        %558 = vmatprep.subr.bf16.mxu0 0
        %559 = vmatpush1.bf16.msra.mxu0 %v536
        %560 = vmatprep.subr.bf16.mxu0 0
        %561 = vmatpush1.bf16.msra.mxu0 %v537
        %562 = vmatprep.subr.bf16.mxu0 0
        %563 = vmatpush1.bf16.msra.mxu0 0
        %564 = vmatprep.subr.bf16.mxu0 0
        %565 = vmatpush1.bf16.msra.mxu0 0
        %566 = vmatprep.subr.bf16.mxu0 0
        %567 = vmatpush1.bf16.msra.mxu0 0
        %568 = vmatprep.subr.bf16.mxu0 0
        %569 = vmatpush1.bf16.msra.mxu0 0
        %570 = vmatprep.subr.bf16.mxu0 0
        %571 = vmatpush1.bf16.msra.mxu0 0
        %572 = vmatprep.subr.bf16.mxu0 0
        %573 = vmatpush1.bf16.msra.mxu0 0
        %574 = vmatprep.subr.bf16.mxu0 0
        %575 = vmatpush1.bf16.msra.mxu0 0
        %576 = vmatprep.subr.bf16.mxu0 0
        %577 = vmatpush1.bf16.msra.mxu0 0
        %578 = vmatprep.mubr.bf16.mxu0 0
        %579 = vmatmul.mubr.bf16.gmra.mrb[0].mxu0 %v481
        %v580 = vpop.f32.mrb[0].mxu0
        %v581 = vadd.f32 0.0, %v580
        %v582 = vpop.f32.mrb[0].mxu0
        %v583 = vpop.f32.mrb[0].mxu0
        %v584 = vpop.f32.mrb[0].mxu0
        %585 = vdwg.mxu0
        %v586 = vadd.f32 %v480, %v581
        %587 = vst [vmem:[#allocation2] sm:$0xff] %v586
        %p588 = scmp.eq.s32.totalorder %s24, 1
        // Predicated region
        $region98: #{gcnn_block_forward.3} parent=88 // pred_check
          %p589 = pneg %p588
        $region99: #{gcnn_block_forward.3} parent=88 // pred_check_branch
          %591 = sbr.rel (%p589) target = $region101
        $region100: #{gcnn_block_forward.3} parent=88 // pred_region
          %v592 = vld [vmem:[%s4] sm:$0xff]
          %v593 = vld [vmem:[%s465] sm:$0xff]
          %v594 = vld [vmem:[%s5] sm:$0xff]
          %v595 = vld [vmem:[%s469] sm:$0xf]
          %v596 = vunpack.c.l.bf16 %v595
          %vm597 = vcmask 64512
          %v599 = vsel %vm597, %v594, 0
          %601 = vmatprep.subr.mxu0 0.0
          %602 = vmatpush1.msra.mxu0 %v596
          %603 = vmatprep.subr.mxu0 0.0
          %604 = vmatpush1.msra.mxu0 0.0
          %605 = vmatprep.subr.mxu0 0.0
          %606 = vmatpush1.msra.mxu0 0.0
          %607 = vmatprep.subr.mxu0 0.0
          %608 = vmatpush1.msra.mxu0 0.0
          %609 = vmatprep.subr.mxu0 0.0
          %610 = vmatpush1.msra.mxu0 0.0
          %611 = vmatprep.subr.mxu0 0.0
          %612 = vmatpush1.msra.mxu0 0.0
          %613 = vmatprep.subr.mxu0 0.0
          %614 = vmatpush1.msra.mxu0 0.0
          %615 = vmatprep.subr.mxu0 0.0
          %616 = vmatpush1.msra.mxu0 0.0
          %617 = vmatprep.subr.mxu0 0.0
          %618 = vmatpush1.msra.mxu0 0.0
          %619 = vmatprep.subr.mxu0 0.0
          %620 = vmatpush1.msra.mxu0 0.0
          %621 = vmatprep.subr.mxu0 0.0
          %622 = vmatpush1.msra.mxu0 0.0
          %623 = vmatprep.subr.mxu0 0.0
          %624 = vmatpush1.msra.mxu0 0.0
          %625 = vmatprep.subr.mxu0 0.0
          %626 = vmatpush1.msra.mxu0 0.0
          %627 = vmatprep.subr.mxu0 0.0
          %628 = vmatpush1.msra.mxu0 0.0
          %629 = vmatprep.subr.mxu0 0.0
          %630 = vmatpush1.msra.mxu0 0.0
          %631 = vmatprep.subr.mxu0 0.0
          %632 = vmatpush1.msra.mxu0 0.0
          %633 = vmatprep.subr.mxu0 0.0
          %634 = vmatpush1.msra.mxu0 0.0
          %635 = vmatprep.subr.mxu0 0.0
          %636 = vmatpush1.msra.mxu0 0.0
          %637 = vmatprep.subr.mxu0 0.0
          %638 = vmatpush1.msra.mxu0 0.0
          %639 = vmatprep.subr.mxu0 0.0
          %640 = vmatpush1.msra.mxu0 0.0
          %641 = vmatprep.subr.mxu0 0.0
          %642 = vmatpush1.msra.mxu0 0.0
          %643 = vmatprep.subr.mxu0 0.0
          %644 = vmatpush1.msra.mxu0 0.0
          %645 = vmatprep.subr.mxu0 0.0
          %646 = vmatpush1.msra.mxu0 0.0
          %647 = vmatprep.subr.mxu0 0.0
          %648 = vmatpush1.msra.mxu0 0.0
          %649 = vmatprep.subr.mxu0 0.0
          %650 = vmatpush1.msra.mxu0 0.0
          %651 = vmatprep.subr.mxu0 0.0
          %652 = vmatpush1.msra.mxu0 0.0
          %653 = vmatprep.subr.mxu0 0.0
          %654 = vmatpush1.msra.mxu0 0.0
          %655 = vmatprep.subr.mxu0 0.0
          %656 = vmatpush1.msra.mxu0 0.0
          %657 = vmatprep.subr.mxu0 0.0
          %658 = vmatpush1.msra.mxu0 0.0
          %659 = vmatprep.subr.mxu0 0.0
          %660 = vmatpush1.msra.mxu0 0.0
          %661 = vmatprep.subr.mxu0 0.0
          %662 = vmatpush1.msra.mxu0 0.0
          %663 = vmatprep.subr.mxu0 0.0
          %664 = vmatpush1.msra.mxu0 0.0
          %665 = vmatprep.mubr.f32.mxu0 0.0
          %666 = vmatmul.mubr.f32.gmra.mrb[0].mxu0 %v599
          %v667 = vpop.f32.mrb[0].mxu0
          %v668 = vadd.f32 0.0, %v667
          %v669 = vpop.f32.mrb[0].mxu0
          %670 = vdwg.mxu0
          %v672 = vsel %vm597, %v592, 0
          %674 = vmatprep.subr.mxu0 0.0
          %675 = vmatpush1.msra.mxu0 %v593
          %676 = vmatprep.subr.mxu0 0.0
          %677 = vmatpush1.msra.mxu0 0.0
          %678 = vmatprep.subr.mxu0 0.0
          %679 = vmatpush1.msra.mxu0 0.0
          %680 = vmatprep.subr.mxu0 0.0
          %681 = vmatpush1.msra.mxu0 0.0
          %682 = vmatprep.subr.mxu0 0.0
          %683 = vmatpush1.msra.mxu0 0.0
          %684 = vmatprep.subr.mxu0 0.0
          %685 = vmatpush1.msra.mxu0 0.0
          %686 = vmatprep.subr.mxu0 0.0
          %687 = vmatpush1.msra.mxu0 0.0
          %688 = vmatprep.subr.mxu0 0.0
          %689 = vmatpush1.msra.mxu0 0.0
          %690 = vmatprep.subr.mxu0 0.0
          %691 = vmatpush1.msra.mxu0 0.0
          %692 = vmatprep.subr.mxu0 0.0
          %693 = vmatpush1.msra.mxu0 0.0
          %694 = vmatprep.subr.mxu0 0.0
          %695 = vmatpush1.msra.mxu0 0.0
          %696 = vmatprep.subr.mxu0 0.0
          %697 = vmatpush1.msra.mxu0 0.0
          %698 = vmatprep.subr.mxu0 0.0
          %699 = vmatpush1.msra.mxu0 0.0
          %700 = vmatprep.subr.mxu0 0.0
          %701 = vmatpush1.msra.mxu0 0.0
          %702 = vmatprep.subr.mxu0 0.0
          %703 = vmatpush1.msra.mxu0 0.0
          %704 = vmatprep.subr.mxu0 0.0
          %705 = vmatpush1.msra.mxu0 0.0
          %706 = vmatprep.subr.mxu0 0.0
          %707 = vmatpush1.msra.mxu0 0.0
          %708 = vmatprep.subr.mxu0 0.0
          %709 = vmatpush1.msra.mxu0 0.0
          %710 = vmatprep.subr.mxu0 0.0
          %711 = vmatpush1.msra.mxu0 0.0
          %712 = vmatprep.subr.mxu0 0.0
          %713 = vmatpush1.msra.mxu0 0.0
          %714 = vmatprep.subr.mxu0 0.0
          %715 = vmatpush1.msra.mxu0 0.0
          %716 = vmatprep.subr.mxu0 0.0
          %717 = vmatpush1.msra.mxu0 0.0
          %718 = vmatprep.subr.mxu0 0.0
          %719 = vmatpush1.msra.mxu0 0.0
          %720 = vmatprep.subr.mxu0 0.0
          %721 = vmatpush1.msra.mxu0 0.0
          %722 = vmatprep.subr.mxu0 0.0
          %723 = vmatpush1.msra.mxu0 0.0
          %724 = vmatprep.subr.mxu0 0.0
          %725 = vmatpush1.msra.mxu0 0.0
          %726 = vmatprep.subr.mxu0 0.0
          %727 = vmatpush1.msra.mxu0 0.0
          %728 = vmatprep.subr.mxu0 0.0
          %729 = vmatpush1.msra.mxu0 0.0
          %730 = vmatprep.subr.mxu0 0.0
          %731 = vmatpush1.msra.mxu0 0.0
          %732 = vmatprep.subr.mxu0 0.0
          %733 = vmatpush1.msra.mxu0 0.0
          %734 = vmatprep.subr.mxu0 0.0
          %735 = vmatpush1.msra.mxu0 0.0
          %736 = vmatprep.subr.mxu0 0.0
          %737 = vmatpush1.msra.mxu0 0.0
          %738 = vmatprep.mubr.f32.mxu0 0.0
          %739 = vmatmul.mubr.f32.gmra.mrb[0].mxu0 %v672
          %v740 = vpop.f32.mrb[0].mxu0
          %v741 = vadd.f32 %v668, %v740
          %v742 = vpop.f32.mrb[0].mxu0
          %743 = vdwg.mxu0
          %v744 = vld [vmem:[%s6] sm:$0xff]
          %v745 = vld [vmem:[#allocation2] sm:$0xff]
          %v747 = vsel %vm597, %v744, 0
          %749 = vmatprep.subr.mxu0 0.0
          %750 = vmatpush1.msra.mxu0 %v745
          %751 = vmatprep.subr.mxu0 0.0
          %752 = vmatpush1.msra.mxu0 0.0
          %753 = vmatprep.subr.mxu0 0.0
          %754 = vmatpush1.msra.mxu0 0.0
          %755 = vmatprep.subr.mxu0 0.0
          %756 = vmatpush1.msra.mxu0 0.0
          %757 = vmatprep.subr.mxu0 0.0
          %758 = vmatpush1.msra.mxu0 0.0
          %759 = vmatprep.subr.mxu0 0.0
          %760 = vmatpush1.msra.mxu0 0.0
          %761 = vmatprep.subr.mxu0 0.0
          %762 = vmatpush1.msra.mxu0 0.0
          %763 = vmatprep.subr.mxu0 0.0
          %764 = vmatpush1.msra.mxu0 0.0
          %765 = vmatprep.subr.mxu0 0.0
          %766 = vmatpush1.msra.mxu0 0.0
          %767 = vmatprep.subr.mxu0 0.0
          %768 = vmatpush1.msra.mxu0 0.0
          %769 = vmatprep.subr.mxu0 0.0
          %770 = vmatpush1.msra.mxu0 0.0
          %771 = vmatprep.subr.mxu0 0.0
          %772 = vmatpush1.msra.mxu0 0.0
          %773 = vmatprep.subr.mxu0 0.0
          %774 = vmatpush1.msra.mxu0 0.0
          %775 = vmatprep.subr.mxu0 0.0
          %776 = vmatpush1.msra.mxu0 0.0
          %777 = vmatprep.subr.mxu0 0.0
          %778 = vmatpush1.msra.mxu0 0.0
          %779 = vmatprep.subr.mxu0 0.0
          %780 = vmatpush1.msra.mxu0 0.0
          %781 = vmatprep.subr.mxu0 0.0
          %782 = vmatpush1.msra.mxu0 0.0
          %783 = vmatprep.subr.mxu0 0.0
          %784 = vmatpush1.msra.mxu0 0.0
          %785 = vmatprep.subr.mxu0 0.0
          %786 = vmatpush1.msra.mxu0 0.0
          %787 = vmatprep.subr.mxu0 0.0
          %788 = vmatpush1.msra.mxu0 0.0
          %789 = vmatprep.subr.mxu0 0.0
          %790 = vmatpush1.msra.mxu0 0.0
          %791 = vmatprep.subr.mxu0 0.0
          %792 = vmatpush1.msra.mxu0 0.0
          %793 = vmatprep.subr.mxu0 0.0
          %794 = vmatpush1.msra.mxu0 0.0
          %795 = vmatprep.subr.mxu0 0.0
          %796 = vmatpush1.msra.mxu0 0.0
          %797 = vmatprep.subr.mxu0 0.0
          %798 = vmatpush1.msra.mxu0 0.0
          %799 = vmatprep.subr.mxu0 0.0
          %800 = vmatpush1.msra.mxu0 0.0
          %801 = vmatprep.subr.mxu0 0.0
          %802 = vmatpush1.msra.mxu0 0.0
          %803 = vmatprep.subr.mxu0 0.0
          %804 = vmatpush1.msra.mxu0 0.0
          %805 = vmatprep.subr.mxu0 0.0
          %806 = vmatpush1.msra.mxu0 0.0
          %807 = vmatprep.subr.mxu0 0.0
          %808 = vmatpush1.msra.mxu0 0.0
          %809 = vmatprep.subr.mxu0 0.0
          %810 = vmatpush1.msra.mxu0 0.0
          %811 = vmatprep.subr.mxu0 0.0
          %812 = vmatpush1.msra.mxu0 0.0
          %813 = vmatprep.mubr.f32.mxu0 0.0
          %814 = vmatmul.mubr.f32.gmra.mrb[0].mxu0 %v747
          %v815 = vpop.f32.mrb[0].mxu0
          %v816 = vadd.f32 0.0, %v815
          %v817 = vpop.f32.mrb[0].mxu0
          %818 = vdwg.mxu0
          %v819 = vadd.f32 %v741, %v816
          %v820 = vld [vmem:[%s7] sm:$0xff]
          %822 = vset.pattern.permute.xlu0 0
          %823 = vperm.xlu0 %822, %v820
          %v824 = vpop.permute.xlu0 %823
          %v826 = vadd.f32 %v819, %v824
          %v827 = vmax.f32 %v826, 0.0
          %828 = vst [vmem:[%s473] sm:$0xff] %v827
        $region101: #{gcnn_block_forward.3} parent=88 // pred_fallthru
          _
        %p829 = scmp.lt.s32.totalorder %s23, 1
        %s830 = scalar_select %p829, %s23, 1
        %s831 = smul.addr %s830, 8
        %s832 = scalar_lea.vmem %s8, %s831
        // Predicated region
        $region102: #{gcnn_block_forward.3} parent=88 // pred_check
          %p833 = pneg %p239
        $region103: #{gcnn_block_forward.3} parent=88 // pred_check_branch
          %835 = sbr.rel (%p833) target = $region105
        $region104: #{gcnn_block_forward.3} parent=88 // pred_region
          _
        $region105: #{gcnn_block_forward.3} parent=88 // pred_fallthru
          _
      $region89: #{gcnn_block_forward.3} parent=5 // pred_fallthru
        _
      %p836 = scmp.le.s32.totalorder 2, %s14
      // Predicated region
      $region106: #{gcnn_block_forward.3} parent=5 // pred_check
        %p837 = pneg %p836
      $region107: #{gcnn_block_forward.3} parent=5 // pred_check_branch
        %839 = sbr.rel (%p837) target = $region109
      $region108: #{gcnn_block_forward.3} parent=5 // pred_region
        %s840 = ssub.s32 %s14, 2
        // Predicated region
        $region110: #{gcnn_block_forward.3} parent=108 // pred_check
          %p841 = pneg %p245
        $region111: #{gcnn_block_forward.3} parent=108 // pred_check_branch
          %843 = sbr.rel (%p841) target = $region113
        $region112: #{gcnn_block_forward.3} parent=108 // pred_region
          %p844 = scmp.lt.s32.totalorder %s25, 1
          %s845 = scalar_select %p844, %s25, 1
          %s846 = smul.addr %s845, 8
          %s847 = scalar_lea.vmem %s8, %s846
        $region113: #{gcnn_block_forward.3} parent=108 // pred_fallthru
          _
      $region109: #{gcnn_block_forward.3} parent=5 // pred_fallthru
        _
    $region6: #{gcnn_block_forward.3} parent=1 // loop_footer
      %s18 = sadd.s32 1, %s14
    $region7: #{gcnn_block_forward.3} parent=1 // loop_footer_branch
      %13 = sbr.rel target = $region3
    $region8: #{gcnn_block_forward.3} parent=1 // loop_exit
      _

</llo_original>
